<compile_context>
chip_gen: v5e
topology: v5e:2x2
jax: 0.10.0
libtpu: 0.0.40
codegen_flags: <defaults>
</compile_context>

<pallas_src>
import functools

import jax
import jax.numpy as jnp
from jax.experimental import pallas as pl
from jax.experimental.pallas import tpu as pltpu

LANE = 128


def _round_up(x, m):
    return ((x + m - 1) // m) * m


# ----------------------------------------------------------------------------
# Graph preprocessing (plain JAX, done ONCE per graph and cached):
# dense symmetric-normalized adjacency, mirroring PyG GCNConv's gcn_norm.
# Duplicate edges accumulate weight (same as PyG's scatter-add); dedupe
# edge_index upstream if strictly-unweighted semantics are intended.
# ----------------------------------------------------------------------------
def normalized_adjacency(edge_index, num_nodes):
    src, dst = edge_index[0], edge_index[1]
    adj = jnp.zeros((num_nodes, num_nodes), jnp.float32)
    adj = adj.at[dst, src].add(1.0)                     # message src -> dst
    adj = adj + jnp.eye(num_nodes, dtype=jnp.float32)   # self-loops
    deg = jnp.sum(adj, axis=1)
    d_inv_sqrt = jnp.where(deg > 0, 1.0 / jnp.sqrt(deg), 0.0)
    return adj * d_inv_sqrt[:, None] * d_inv_sqrt[None, :]


# ----------------------------------------------------------------------------
# Generation-aware tile / VMEM-budget selection.
# ----------------------------------------------------------------------------
def _choose_tile_and_vmem(n_pad, f_in_pad, h_pad, f_out_pad, use_xw_scratch):
    kind = jax.devices()[0].device_kind.lower()
    prefer_256 = any(s in kind for s in ("v6", "v7", "tpu7"))   # 2x256 MXU gens
    try:
        vmem_cap = int(pltpu.get_tpu_info().vmem_capacity_bytes)
    except Exception:
        vmem_cap = 64 * 1024 * 1024     # conservative (v7x per-TC VMEM)

    def vmem_estimate(tm):
        a_tile = tm * n_pad * 2 * 2                       # bf16, double-buffered
        out_tile = tm * f_out_pad * 4 * 2                 # f32, double-buffered
        consts = (n_pad * f_in_pad * 2 + f_in_pad * h_pad * 2 + h_pad * 4
                  + h_pad * f_out_pad * 2 + f_out_pad * 4)
        scratch = n_pad * h_pad * 2 * (2 if use_xw_scratch else 1)
        return a_tile + out_tile + consts + scratch

    candidates = []
    if prefer_256 and n_pad % 256 == 0:
        candidates.append(256)
    candidates.append(128)                                # n_pad is a mult of 128
    tm = candidates[-1]
    for c in candidates:                                  # biggest tile that fits
        if vmem_estimate(c) <= 0.85 * vmem_cap:
            tm = c
            break
    vmem_limit = int(min(vmem_cap, max(vmem_estimate(tm) * 1.5,
                                       32 * 1024 * 1024)))
    return tm, vmem_limit


# ----------------------------------------------------------------------------
# Fused 2-layer GCN kernel.
#   grid = (phase, row_tile); phase 0 fills the hidden scratch, phase 1 emits
#   the output row tiles.  Hidden activation never leaves VMEM.
# ----------------------------------------------------------------------------
def _fused_gcn2_kernel(a_ref, x_ref, w1_ref, b1_ref, w2_ref, b2_ref, o_ref,
                       *scratch, tm, relu1, relu2, l1_ax_first):
    if l1_ax_first:
        (h_ref,) = scratch
        xw_ref = None
    else:
        h_ref, xw_ref = scratch

    phase = pl.program_id(0)
    tile = pl.program_id(1)

    # ---------------- Phase 0: hidden activation into the VMEM scratch -------
    @pl.when(phase == 0)
    def _layer1():
        a_tile = a_ref[...]                                   # (TM, N_pad) bf16
        if l1_ax_first:
            # (A_tile @ X) @ W1 : N^2 contraction uses F_in_pad lanes.
            ax = jnp.dot(a_tile, x_ref[...],
                         preferred_element_type=jnp.float32)
            h = jnp.dot(ax.astype(jnp.bfloat16), w1_ref[...],
                        preferred_element_type=jnp.float32)
        else:
            # A_tile @ (X @ W1) : N^2 contraction uses H_pad lanes.
            @pl.when(tile == 0)
            def _():
                xw_ref[...] = jnp.dot(
                    x_ref[...], w1_ref[...],
                    preferred_element_type=jnp.float32).astype(jnp.bfloat16)
            h = jnp.dot(a_tile, xw_ref[...],
                        preferred_element_type=jnp.float32)
        h = h + b1_ref[...]
        if relu1:
            h = jnp.maximum(h, 0.0)
        row0 = pl.multiple_of(tile * tm, tm)
        h_ref[pl.ds(row0, tm), :] = h.astype(jnp.bfloat16)    # single bf16 cast
        # Keep the (revisited) output buffer deterministic; phase 1 overwrites.
        o_ref[...] = jnp.zeros_like(o_ref)

    # ---------------- Phase 1: output row tiles from the on-chip hidden ------
    @pl.when(phase == 1)
    def _layer2():
        ah = jnp.dot(a_ref[...], h_ref[...],
                     preferred_element_type=jnp.float32)
        out = jnp.dot(ah.astype(jnp.bfloat16), w2_ref[...],
                      preferred_element_type=jnp.float32) + b2_ref[...]
        if relu2:
            out = jnp.maximum(out, 0.0)
        o_ref[...] = out.astype(o_ref.dtype)


def _build_fused_call(*, n_pad, f_in_pad, h_pad, f_out_pad, tm, vmem_limit,
                      relu1, relu2, l1_ax_first, single_buffer):
    num_tiles = n_pad // tm

    def const_spec(shape):
        idx = lambda p, i: (0,) * len(shape)
        if single_buffer:
            # Grid-invariant block -> one buffer is enough (halves its VMEM).
            return pl.BlockSpec(shape, idx, pipeline_mode=pl.Buffered(1))
        return pl.BlockSpec(shape, idx)

    scratch_shapes = [pltpu.VMEM((n_pad, h_pad), jnp.bfloat16)]       # hidden H
    if not l1_ax_first:
        scratch_shapes.append(pltpu.VMEM((n_pad, h_pad), jnp.bfloat16))  # X @ W1

    kernel = functools.partial(_fused_gcn2_kernel, tm=tm, relu1=relu1,
                               relu2=relu2, l1_ax_first=l1_ax_first)
    return pl.pallas_call(
        kernel,
        out_shape=jax.ShapeDtypeStruct((n_pad, f_out_pad), jnp.float32),
        grid=(2, num_tiles),
        in_specs=[
            pl.BlockSpec((tm, n_pad), lambda p, i: (i, 0)),   # A_hat row tile (bf16)
            const_spec((n_pad, f_in_pad)),                    # X   (bf16)
            const_spec((f_in_pad, h_pad)),                    # W1  (bf16)
            const_spec((1, h_pad)),                           # b1  (f32)
            const_spec((h_pad, f_out_pad)),                   # W2  (bf16)
            const_spec((1, f_out_pad)),                       # b2  (f32)
        ],
        out_specs=pl.BlockSpec((tm, f_out_pad), lambda p, i: (i, 0)),
        scratch_shapes=scratch_shapes,
        compiler_params=pltpu.CompilerParams(
            # Both axes sequential: phase 1 consumes the scratch written by all
            # phase-0 tiles.  See TODO(synk) at top for the megacore variant.
            dimension_semantics=("arbitrary", "arbitrary"),
            vmem_limit_bytes=vmem_limit,
        ),
    )


def fused_gcn2(a_pad, x_pad, w1p, b1p, w2p, b2p, *, tm, vmem_limit,
               relu1, relu2, l1_ax_first):
    shapes = dict(n_pad=a_pad.shape[0], f_in_pad=x_pad.shape[1],
                  h_pad=w1p.shape[1], f_out_pad=w2p.shape[1])
    try:
        call = _build_fused_call(tm=tm, vmem_limit=vmem_limit, relu1=relu1,
                                 relu2=relu2, l1_ax_first=l1_ax_first,
                                 single_buffer=True, **shapes)
        return call(a_pad, x_pad, w1p, b1p, w2p, b2p)
    except Exception:
        # TODO(synk): pl.Buffered(1) rejected by this JAX/Mosaic version; fall
        # back to default double buffering for the grid-invariant inputs.
        call = _build_fused_call(tm=tm, vmem_limit=vmem_limit, relu1=relu1,
                                 relu2=relu2, l1_ax_first=l1_ax_first,
                                 single_buffer=False, **shapes)
        return call(a_pad, x_pad, w1p, b1p, w2p, b2p)


# ----------------------------------------------------------------------------
# PressureGNN forward: two GCNConv layers fused into one Pallas kernel.
# ----------------------------------------------------------------------------
class PressureGNNPallas:
    def __init__(self):
        self.layers = []        # list of (W f32, b f32, apply_relu)
        self._a_hat = None      # cached f32 normalized adjacency (unpadded)
        self._num_nodes = None
        self._prep = None       # cached padded params + tiling choice

    def add_gcn_layer(self, key, in_channels, out_channels, activation_relu):
        # Glorot-uniform-like init (matches GCNConv weight shape).
        limit = jnp.sqrt(6.0 / (in_channels + out_channels))
        w = jax.random.uniform(
            key, (in_channels, out_channels), jnp.float32, -limit, limit)
        b = jnp.zeros((1, out_channels), jnp.float32)
        self.layers.append((w, b, activation_relu))
        self._prep = None

    def set_graph(self, edge_index, num_nodes):
        """Build and cache A_hat once; reused across forward calls."""
        self._a_hat = normalized_adjacency(edge_index, num_nodes)
        self._num_nodes = num_nodes
        self._prep = None

    def _prepare(self):
        assert len(self.layers) == 2, "fused kernel covers the 2-layer GCN stack"
        # TODO(synk): deeper stacks would chain fused pairs; BatchNorm/Dropout
        # from add_layer are identity at inference and omitted here.
        (w1, b1, relu1), (w2, b2, relu2) = self.layers
        n = self._num_nodes
        f_in, h_dim = w1.shape
        f_out = w2.shape[1]
        f_in_pad = _round_up(f_in, LANE)
        h_pad = _round_up(h_dim, LANE)
        f_out_pad = _round_up(f_out, LANE)
        # Layer-1 matmul ordering judged on the PADDED widths the MXU sees.
        l1_ax_first = f_in_pad <= h_pad

        n_pad = _round_up(n, LANE)
        tm, vmem_limit = _choose_tile_and_vmem(
            n_pad, f_in_pad, h_pad, f_out_pad, use_xw_scratch=not l1_ax_first)

        # Zero padding is numerically inert: padded A rows/cols are zero, so
        # padded nodes never contribute to aggregation; padded feature columns
        # are zero in X/W/b and are sliced off after the call.
        # Note: A_hat kept in bf16 (f32 accumulation in-kernel); for graphs
        # with very high-degree nodes consider f32 A_hat (see review note).
        a_pad = (jnp.zeros((n_pad, n_pad), jnp.float32)
                 .at[:n, :n].set(self._a_hat).astype(jnp.bfloat16))
        w1p = (jnp.zeros((f_in_pad, h_pad), jnp.float32)
               .at[:f_in, :h_dim].set(w1).astype(jnp.bfloat16))
        b1p = jnp.zeros((1, h_pad), jnp.float32).at[:, :h_dim].set(b1)
        w2p = (jnp.zeros((h_pad, f_out_pad), jnp.float32)
               .at[:h_dim, :f_out].set(w2).astype(jnp.bfloat16))
        b2p = jnp.zeros((1, f_out_pad), jnp.float32).at[:, :f_out].set(b2)

        self._prep = dict(
            n=n, n_pad=n_pad, f_in=f_in, f_in_pad=f_in_pad,
            f_out=f_out, f_out_pad=f_out_pad, h_pad=h_pad,
            tm=tm, vmem_limit=vmem_limit,
            a_pad=a_pad, w1p=w1p, b1p=b1p, w2p=w2p, b2p=b2p,
            relu1=relu1, relu2=relu2, l1_ax_first=l1_ax_first)

    def forward(self, x, edge_index=None):
        if self._a_hat is None:
            self.set_graph(edge_index, x.shape[0])
        if self._prep is None:
            self._prepare()
        p = self._prep
        x_pad = (jnp.zeros((p["n_pad"], p["f_in_pad"]), jnp.float32)
                 .at[: p["n"], : p["f_in"]].set(x).astype(jnp.bfloat16))
        out_pad = fused_gcn2(
            p["a_pad"], x_pad, p["w1p"], p["b1p"], p["w2p"], p["b2p"],
            tm=p["tm"], vmem_limit=p["vmem_limit"],
            relu1=p["relu1"], relu2=p["relu2"], l1_ax_first=p["l1_ax_first"])
        return out_pad[: p["n"], : p["f_out"]]


# ----------------------------------------------------------------------------
# References for correctness checks.
# ----------------------------------------------------------------------------
def reference_f32(model, x, edge_index):
    """Pure f32 semantics of the PyTorch module (loose check)."""
    a_hat = normalized_adjacency(edge_index, x.shape[0])
    for w, b, apply_relu in model.layers:
        x = a_hat @ (x @ w) + b
        if apply_relu:
            x = jnp.maximum(x, 0.0)
    return x


def reference_bf16_mirror(model, x):
    """Exact dtype/ordering mirror of the fused kernel, in plain JAX."""
    p = model._prep
    a = p["a_pad"]
    x_pad = (jnp.zeros((p["n_pad"], p["f_in_pad"]), jnp.float32)
             .at[: p["n"], : p["f_in"]].set(x).astype(jnp.bfloat16))
    if p["l1_ax_first"]:
        ax = jnp.dot(a, x_pad, preferred_element_type=jnp.float32)
        h = jnp.dot(ax.astype(jnp.bfloat16), p["w1p"],
                    preferred_element_type=jnp.float32)
    else:
        xw = jnp.dot(x_pad, p["w1p"],
                     preferred_element_type=jnp.float32).astype(jnp.bfloat16)
        h = jnp.dot(a, xw, preferred_element_type=jnp.float32)
    h = h + p["b1p"]
    if p["relu1"]:
        h = jnp.maximum(h, 0.0)
    h_bf = h.astype(jnp.bfloat16)
    ah = jnp.dot(a, h_bf, preferred_element_type=jnp.float32)
    out = jnp.dot(ah.astype(jnp.bfloat16), p["w2p"],
                  preferred_element_type=jnp.float32) + p["b2p"]
    if p["relu2"]:
        out = jnp.maximum(out, 0.0)
    return out[: p["n"], : p["f_out"]]


if __name__ == "__main__":
    key = jax.random.PRNGKey(0)
    k_x, k_e, k_l1, k_l2 = jax.random.split(key, 4)

    # Small synthetic graph: 16 nodes, 8 input features, 32 hidden, 8 outputs.
    num_nodes = 16
    in_feats = 8
    hidden = 32
    out_feats = 8

    x = jax.random.normal(k_x, (num_nodes, in_feats), jnp.float32)
    num_edges = 32
    edge_index = jax.random.randint(k_e, (2, num_edges), 0, num_nodes)

    # Model: GCNConv(in->hidden, ReLU) + GCNConv(hidden->out, identity).
    model = PressureGNNPallas()
    model.add_gcn_layer(k_l1, in_feats, hidden, activation_relu=True)
    model.add_gcn_layer(k_l2, hidden, out_feats, activation_relu=False)
    model.set_graph(edge_index, num_nodes)     # A_hat built once, cached

    out = model.forward(x)
    out = jax.block_until_ready(out)
    assert out.shape == (num_nodes, out_feats)

    # Tight check against an exact dtype/ordering mirror of the kernel math.
    ref_bf = reference_bf16_mirror(model, x)
    assert jnp.allclose(out, ref_bf, atol=1e-3, rtol=1e-3)

    # Loose check against the full-f32 module semantics (bf16 MXU inputs).
    ref_f32 = reference_f32(model, x, edge_index)
    assert jnp.allclose(out, ref_f32, atol=1e-1, rtol=1e-1)

    print("KERNEL_OK")
</pallas_src>

<mosaic_0001>
module attributes {stable_mosaic.version = 11 : i64} {
  func.func @_fused_gcn2_kernel(%arg0: i32, %arg1: i32, %arg2: memref<128x128xbf16, #tpu.memory_space<vmem>>, %arg3: memref<128x128xbf16, #tpu.memory_space<vmem>>, %arg4: memref<128x128xbf16, #tpu.memory_space<vmem>>, %arg5: memref<1x128xf32, #tpu.memory_space<vmem>>, %arg6: memref<128x128xbf16, #tpu.memory_space<vmem>>, %arg7: memref<1x128xf32, #tpu.memory_space<vmem>>, %arg8: memref<128x128xf32, #tpu.memory_space<vmem>>, %arg9: memref<128x128xbf16, #tpu.memory_space<vmem>>) attributes {dimension_semantics = [#tpu.dimension_semantics<arbitrary>, #tpu.dimension_semantics<arbitrary>], iteration_bounds = array<i64: 2, 1>, scalar_prefetch = 0 : i64, scratch_operands = 1 : i64, tpu.core_type = #tpu.core_type<tc>, window_params = [{transform_indices = @transform_0, window_bounds = array<i64: 128, 128>}, {pipeline_mode = #tpu.pipeline_mode<synchronous>, transform_indices = @transform_1, window_bounds = array<i64: 128, 128>}, {pipeline_mode = #tpu.pipeline_mode<synchronous>, transform_indices = @transform_2, window_bounds = array<i64: 128, 128>}, {pipeline_mode = #tpu.pipeline_mode<synchronous>, transform_indices = @transform_3, window_bounds = array<i64: 1, 128>}, {pipeline_mode = #tpu.pipeline_mode<synchronous>, transform_indices = @transform_4, window_bounds = array<i64: 128, 128>}, {pipeline_mode = #tpu.pipeline_mode<synchronous>, transform_indices = @transform_5, window_bounds = array<i64: 1, 128>}, {transform_indices = @transform_6, window_bounds = array<i64: 128, 128>}]} {
    %c0_i32 = arith.constant 0 : i32
    %0 = arith.cmpi eq, %arg0, %c0_i32 : i32
    %1 = arith.extui %0 : i1 to i32
    %c0_i32_0 = arith.constant 0 : i32
    %2 = arith.cmpi ne, %1, %c0_i32_0 : i32
    scf.if %2 {
      %c0 = arith.constant 0 : index
      %c0_2 = arith.constant 0 : index
      %6 = vector.load %arg2[%c0, %c0_2] : memref<128x128xbf16, #tpu.memory_space<vmem>>, vector<128x128xbf16>
      %c0_3 = arith.constant 0 : index
      %c0_4 = arith.constant 0 : index
      %7 = vector.load %arg3[%c0_3, %c0_4] : memref<128x128xbf16, #tpu.memory_space<vmem>>, vector<128x128xbf16>
      %cst = arith.constant dense<0.000000e+00> : vector<128x128xf32>
      %8 = tpu.matmul %6, %7, %cst {dimension_numbers = #tpu.dot_dimension_numbers<[1], [0], [0], [1], [0, 0, 1, 1], [], []>} : vector<128x128xbf16>, vector<128x128xbf16>, vector<128x128xf32> -> vector<128x128xf32>
      %9 = arith.truncf %8 : vector<128x128xf32> to vector<128x128xbf16>
      %c0_5 = arith.constant 0 : index
      %c0_6 = arith.constant 0 : index
      %10 = vector.load %arg4[%c0_5, %c0_6] : memref<128x128xbf16, #tpu.memory_space<vmem>>, vector<128x128xbf16>
      %cst_7 = arith.constant dense<0.000000e+00> : vector<128x128xf32>
      %11 = tpu.matmul %9, %10, %cst_7 {dimension_numbers = #tpu.dot_dimension_numbers<[1], [0], [0], [1], [0, 0, 1, 1], [], []>} : vector<128x128xbf16>, vector<128x128xbf16>, vector<128x128xf32> -> vector<128x128xf32>
      %c0_8 = arith.constant 0 : index
      %c0_9 = arith.constant 0 : index
      %12 = vector.load %arg5[%c0_8, %c0_9] : memref<1x128xf32, #tpu.memory_space<vmem>>, vector<1x128xf32>
      %13 = vector.broadcast %12 : vector<1x128xf32> to vector<128x128xf32>
      %14 = arith.addf %11, %13 : vector<128x128xf32>
      %cst_10 = arith.constant 0.000000e+00 : f32
      %15 = vector.broadcast %cst_10 : f32 to vector<128x128xf32>
      %16 = arith.maximumf %14, %15 : vector<128x128xf32>
      %c128_i32 = arith.constant 128 : i32
      %17 = arith.muli %arg1, %c128_i32 : i32
      %18 = tpu.assume_multiple %17, 128 : i32
      %19 = arith.truncf %16 : vector<128x128xf32> to vector<128x128xbf16>
      %20 = arith.index_cast %18 : i32 to index
      %c0_11 = arith.constant 0 : index
      %21 = vector.load %arg9[%20, %c0_11] : memref<128x128xbf16, #tpu.memory_space<vmem>>, vector<128x128xbf16>
      tpu.vector_store %arg9[%20, %c0_11], %19 {strides = array<i32>} : memref<128x128xbf16, #tpu.memory_space<vmem>>, vector<128x128xbf16>,
      %cst_12 = arith.constant 0.000000e+00 : f32
      %22 = vector.broadcast %cst_12 : f32 to vector<128x128xf32>
      %c0_13 = arith.constant 0 : index
      %c0_14 = arith.constant 0 : index
      %23 = vector.load %arg8[%c0_13, %c0_14] : memref<128x128xf32, #tpu.memory_space<vmem>>, vector<128x128xf32>
      tpu.vector_store %arg8[%c0_13, %c0_14], %22 {strides = array<i32>} : memref<128x128xf32, #tpu.memory_space<vmem>>, vector<128x128xf32>,
    } else {
    }
    %c1_i32 = arith.constant 1 : i32
    %3 = arith.cmpi eq, %arg0, %c1_i32 : i32
    %4 = arith.extui %3 : i1 to i32
    %c0_i32_1 = arith.constant 0 : i32
    %5 = arith.cmpi ne, %4, %c0_i32_1 : i32
    scf.if %5 {
      %c0 = arith.constant 0 : index
      %c0_2 = arith.constant 0 : index
      %6 = vector.load %arg2[%c0, %c0_2] : memref<128x128xbf16, #tpu.memory_space<vmem>>, vector<128x128xbf16>
      %c0_3 = arith.constant 0 : index
      %c0_4 = arith.constant 0 : index
      %7 = vector.load %arg9[%c0_3, %c0_4] : memref<128x128xbf16, #tpu.memory_space<vmem>>, vector<128x128xbf16>
      %cst = arith.constant dense<0.000000e+00> : vector<128x128xf32>
      %8 = tpu.matmul %6, %7, %cst {dimension_numbers = #tpu.dot_dimension_numbers<[1], [0], [0], [1], [0, 0, 1, 1], [], []>} : vector<128x128xbf16>, vector<128x128xbf16>, vector<128x128xf32> -> vector<128x128xf32>
      %9 = arith.truncf %8 : vector<128x128xf32> to vector<128x128xbf16>
      %c0_5 = arith.constant 0 : index
      %c0_6 = arith.constant 0 : index
      %10 = vector.load %arg6[%c0_5, %c0_6] : memref<128x128xbf16, #tpu.memory_space<vmem>>, vector<128x128xbf16>
      %cst_7 = arith.constant dense<0.000000e+00> : vector<128x128xf32>
      %11 = tpu.matmul %9, %10, %cst_7 {dimension_numbers = #tpu.dot_dimension_numbers<[1], [0], [0], [1], [0, 0, 1, 1], [], []>} : vector<128x128xbf16>, vector<128x128xbf16>, vector<128x128xf32> -> vector<128x128xf32>
      %c0_8 = arith.constant 0 : index
      %c0_9 = arith.constant 0 : index
      %12 = vector.load %arg7[%c0_8, %c0_9] : memref<1x128xf32, #tpu.memory_space<vmem>>, vector<1x128xf32>
      %13 = vector.broadcast %12 : vector<1x128xf32> to vector<128x128xf32>
      %14 = arith.addf %11, %13 : vector<128x128xf32>
      %c0_10 = arith.constant 0 : index
      %c0_11 = arith.constant 0 : index
      %15 = vector.load %arg8[%c0_10, %c0_11] : memref<128x128xf32, #tpu.memory_space<vmem>>, vector<128x128xf32>
      tpu.vector_store %arg8[%c0_10, %c0_11], %14 {strides = array<i32>} : memref<128x128xf32, #tpu.memory_space<vmem>>, vector<128x128xf32>,
    } else {
    }
    return
  }
  func.func @transform_0(%arg0: i32, %arg1: i32) -> (i32, i32) {
    %c0_i32 = arith.constant 0 : i32
    %c0_i32_0 = arith.constant 0 : i32
    return %arg1, %c0_i32 : i32, i32
  }
  func.func @transform_1(%arg0: i32, %arg1: i32) -> (i32, i32) {
    %c0_i32 = arith.constant 0 : i32
    %c0_i32_0 = arith.constant 0 : i32
    %c0_i32_1 = arith.constant 0 : i32
    return %c0_i32, %c0_i32_0 : i32, i32
  }
  func.func @transform_2(%arg0: i32, %arg1: i32) -> (i32, i32) {
    %c0_i32 = arith.constant 0 : i32
    %c0_i32_0 = arith.constant 0 : i32
    %c0_i32_1 = arith.constant 0 : i32
    return %c0_i32, %c0_i32_0 : i32, i32
  }
  func.func @transform_3(%arg0: i32, %arg1: i32) -> (i32, i32) {
    %c0_i32 = arith.constant 0 : i32
    %c0_i32_0 = arith.constant 0 : i32
    %c0_i32_1 = arith.constant 0 : i32
    return %c0_i32, %c0_i32_0 : i32, i32
  }
  func.func @transform_4(%arg0: i32, %arg1: i32) -> (i32, i32) {
    %c0_i32 = arith.constant 0 : i32
    %c0_i32_0 = arith.constant 0 : i32
    %c0_i32_1 = arith.constant 0 : i32
    return %c0_i32, %c0_i32_0 : i32, i32
  }
  func.func @transform_5(%arg0: i32, %arg1: i32) -> (i32, i32) {
    %c0_i32 = arith.constant 0 : i32
    %c0_i32_0 = arith.constant 0 : i32
    %c0_i32_1 = arith.constant 0 : i32
    return %c0_i32, %c0_i32_0 : i32, i32
  }
  func.func @transform_6(%arg0: i32, %arg1: i32) -> (i32, i32) {
    %c0_i32 = arith.constant 0 : i32
    %c0_i32_0 = arith.constant 0 : i32
    return %arg1, %c0_i32 : i32, i32
  }
}

module attributes {stable_mosaic.version = 11 : i64} {
  func.func @_fused_gcn2_kernel(%arg0: i32, %arg1: i32, %arg2: memref<128x128xbf16, #tpu.memory_space<vmem>>, %arg3: memref<128x128xbf16, #tpu.memory_space<vmem>>, %arg4: memref<128x128xbf16, #tpu.memory_space<vmem>>, %arg5: memref<1x128xf32, #tpu.memory_space<vmem>>, %arg6: memref<128x128xbf16, #tpu.memory_space<vmem>>, %arg7: memref<1x128xf32, #tpu.memory_space<vmem>>, %arg8: memref<128x128xf32, #tpu.memory_space<vmem>>, %arg9: memref<128x128xbf16, #tpu.memory_space<vmem>>) attributes {dimension_semantics = [#tpu.dimension_semantics<arbitrary>, #tpu.dimension_semantics<arbitrary>], iteration_bounds = array<i64: 2, 1>, scalar_prefetch = 0 : i64, scratch_operands = 1 : i64, tpu.core_type = #tpu.core_type<tc>, window_params = [{transform_indices = @transform_0, window_bounds = array<i64: 128, 128>}, {pipeline_mode = #tpu.pipeline_mode<synchronous>, transform_indices = @transform_1, window_bounds = array<i64: 128, 128>}, {pipeline_mode = #tpu.pipeline_mode<synchronous>, transform_indices = @transform_2, window_bounds = array<i64: 128, 128>}, {pipeline_mode = #tpu.pipeline_mode<synchronous>, transform_indices = @transform_3, window_bounds = array<i64: 1, 128>}, {pipeline_mode = #tpu.pipeline_mode<synchronous>, transform_indices = @transform_4, window_bounds = array<i64: 128, 128>}, {pipeline_mode = #tpu.pipeline_mode<synchronous>, transform_indices = @transform_5, window_bounds = array<i64: 1, 128>}, {transform_indices = @transform_6, window_bounds = array<i64: 128, 128>}]} {
    %c0_i32 = arith.constant 0 : i32
    %0 = arith.cmpi eq, %arg0, %c0_i32 : i32
    %1 = arith.extui %0 : i1 to i32
    %c0_i32_0 = arith.constant 0 : i32
    %2 = arith.cmpi ne, %1, %c0_i32_0 : i32
    scf.if %2 {
      %c0 = arith.constant 0 : index
      %c0_2 = arith.constant 0 : index
      %6 = vector.load %arg2[%c0, %c0_2] : memref<128x128xbf16, #tpu.memory_space<vmem>>, vector<128x128xbf16>
      %c0_3 = arith.constant 0 : index
      %c0_4 = arith.constant 0 : index
      %7 = vector.load %arg3[%c0_3, %c0_4] : memref<128x128xbf16, #tpu.memory_space<vmem>>, vector<128x128xbf16>
      %cst = arith.constant dense<0.000000e+00> : vector<128x128xf32>
      %8 = tpu.matmul %6, %7, %cst {dimension_numbers = #tpu.dot_dimension_numbers<[1], [0], [0], [1], [0, 0, 1, 1], [], []>} : vector<128x128xbf16>, vector<128x128xbf16>, vector<128x128xf32> -> vector<128x128xf32>
      %9 = arith.truncf %8 : vector<128x128xf32> to vector<128x128xbf16>
      %c0_5 = arith.constant 0 : index
      %c0_6 = arith.constant 0 : index
      %10 = vector.load %arg4[%c0_5, %c0_6] : memref<128x128xbf16, #tpu.memory_space<vmem>>, vector<128x128xbf16>
      %cst_7 = arith.constant dense<0.000000e+00> : vector<128x128xf32>
      %11 = tpu.matmul %9, %10, %cst_7 {dimension_numbers = #tpu.dot_dimension_numbers<[1], [0], [0], [1], [0, 0, 1, 1], [], []>} : vector<128x128xbf16>, vector<128x128xbf16>, vector<128x128xf32> -> vector<128x128xf32>
      %c0_8 = arith.constant 0 : index
      %c0_9 = arith.constant 0 : index
      %12 = vector.load %arg5[%c0_8, %c0_9] : memref<1x128xf32, #tpu.memory_space<vmem>>, vector<1x128xf32>
      %13 = vector.broadcast %12 : vector<1x128xf32> to vector<128x128xf32>
      %14 = arith.addf %11, %13 : vector<128x128xf32>
      %cst_10 = arith.constant 0.000000e+00 : f32
      %15 = vector.broadcast %cst_10 : f32 to vector<128x128xf32>
      %16 = arith.maximumf %14, %15 : vector<128x128xf32>
      %c128_i32 = arith.constant 128 : i32
      %17 = arith.muli %arg1, %c128_i32 : i32
      %18 = tpu.assume_multiple %17, 128 : i32
      %19 = arith.truncf %16 : vector<128x128xf32> to vector<128x128xbf16>
      %20 = arith.index_cast %18 : i32 to index
      %c0_11 = arith.constant 0 : index
      %21 = vector.load %arg9[%20, %c0_11] : memref<128x128xbf16, #tpu.memory_space<vmem>>, vector<128x128xbf16>
      tpu.vector_store %arg9[%20, %c0_11], %19 {strides = array<i32>} : memref<128x128xbf16, #tpu.memory_space<vmem>>, vector<128x128xbf16>,
      %cst_12 = arith.constant 0.000000e+00 : f32
      %22 = vector.broadcast %cst_12 : f32 to vector<128x128xf32>
      %c0_13 = arith.constant 0 : index
      %c0_14 = arith.constant 0 : index
      %23 = vector.load %arg8[%c0_13, %c0_14] : memref<128x128xf32, #tpu.memory_space<vmem>>, vector<128x128xf32>
      tpu.vector_store %arg8[%c0_13, %c0_14], %22 {strides = array<i32>} : memref<128x128xf32, #tpu.memory_space<vmem>>, vector<128x128xf32>,
    } else {
    }
    %c1_i32 = arith.constant 1 : i32
    %3 = arith.cmpi eq, %arg0, %c1_i32 : i32
    %4 = arith.extui %3 : i1 to i32
    %c0_i32_1 = arith.constant 0 : i32
    %5 = arith.cmpi ne, %4, %c0_i32_1 : i32
    scf.if %5 {
      %c0 = arith.constant 0 : index
      %c0_2 = arith.constant 0 : index
      %6 = vector.load %arg2[%c0, %c0_2] : memref<128x128xbf16, #tpu.memory_space<vmem>>, vector<128x128xbf16>
      %c0_3 = arith.constant 0 : index
      %c0_4 = arith.constant 0 : index
      %7 = vector.load %arg9[%c0_3, %c0_4] : memref<128x128xbf16, #tpu.memory_space<vmem>>, vector<128x128xbf16>
      %cst = arith.constant dense<0.000000e+00> : vector<128x128xf32>
      %8 = tpu.matmul %6, %7, %cst {dimension_numbers = #tpu.dot_dimension_numbers<[1], [0], [0], [1], [0, 0, 1, 1], [], []>} : vector<128x128xbf16>, vector<128x128xbf16>, vector<128x128xf32> -> vector<128x128xf32>
      %9 = arith.truncf %8 : vector<128x128xf32> to vector<128x128xbf16>
      %c0_5 = arith.constant 0 : index
      %c0_6 = arith.constant 0 : index
      %10 = vector.load %arg6[%c0_5, %c0_6] : memref<128x128xbf16, #tpu.memory_space<vmem>>, vector<128x128xbf16>
      %cst_7 = arith.constant dense<0.000000e+00> : vector<128x128xf32>
      %11 = tpu.matmul %9, %10, %cst_7 {dimension_numbers = #tpu.dot_dimension_numbers<[1], [0], [0], [1], [0, 0, 1, 1], [], []>} : vector<128x128xbf16>, vector<128x128xbf16>, vector<128x128xf32> -> vector<128x128xf32>
      %c0_8 = arith.constant 0 : index
      %c0_9 = arith.constant 0 : index
      %12 = vector.load %arg7[%c0_8, %c0_9] : memref<1x128xf32, #tpu.memory_space<vmem>>, vector<1x128xf32>
      %13 = vector.broadcast %12 : vector<1x128xf32> to vector<128x128xf32>
      %14 = arith.addf %11, %13 : vector<128x128xf32>
      %c0_10 = arith.constant 0 : index
      %c0_11 = arith.constant 0 : index
      %15 = vector.load %arg8[%c0_10, %c0_11] : memref<128x128xf32, #tpu.memory_space<vmem>>, vector<128x128xf32>
      tpu.vector_store %arg8[%c0_10, %c0_11], %14 {strides = array<i32>} : memref<128x128xf32, #tpu.memory_space<vmem>>, vector<128x128xf32>,
    } else {
    }
    return
  }
  func.func @transform_0(%arg0: i32, %arg1: i32) -> (i32, i32) {
    %c0_i32 = arith.constant 0 : i32
    %c0_i32_0 = arith.constant 0 : i32
    return %arg1, %c0_i32 : i32, i32
  }
  func.func @transform_1(%arg0: i32, %arg1: i32) -> (i32, i32) {
    %c0_i32 = arith.constant 0 : i32
    %c0_i32_0 = arith.constant 0 : i32
    %c0_i32_1 = arith.constant 0 : i32
    return %c0_i32, %c0_i32_0 : i32, i32
  }
  func.func @transform_2(%arg0: i32, %arg1: i32) -> (i32, i32) {
    %c0_i32 = arith.constant 0 : i32
    %c0_i32_0 = arith.constant 0 : i32
    %c0_i32_1 = arith.constant 0 : i32
    return %c0_i32, %c0_i32_0 : i32, i32
  }
  func.func @transform_3(%arg0: i32, %arg1: i32) -> (i32, i32) {
    %c0_i32 = arith.constant 0 : i32
    %c0_i32_0 = arith.constant 0 : i32
    %c0_i32_1 = arith.constant 0 : i32
    return %c0_i32, %c0_i32_0 : i32, i32
  }
  func.func @transform_4(%arg0: i32, %arg1: i32) -> (i32, i32) {
    %c0_i32 = arith.constant 0 : i32
    %c0_i32_0 = arith.constant 0 : i32
    %c0_i32_1 = arith.constant 0 : i32
    return %c0_i32, %c0_i32_0 : i32, i32
  }
  func.func @transform_5(%arg0: i32, %arg1: i32) -> (i32, i32) {
    %c0_i32 = arith.constant 0 : i32
    %c0_i32_0 = arith.constant 0 : i32
    %c0_i32_1 = arith.constant 0 : i32
    return %c0_i32, %c0_i32_0 : i32, i32
  }
  func.func @transform_6(%arg0: i32, %arg1: i32) -> (i32, i32) {
    %c0_i32 = arith.constant 0 : i32
    %c0_i32_0 = arith.constant 0 : i32
    return %arg1, %c0_i32 : i32, i32
  }
}

</mosaic_0001>

<llo_original>
// kernel: tpu_custom_call.1
$region0: #{tpu_custom_call.1}
  #allocation0 [shape = 'u32[]', space=smem, size = 0x4, offset = 0x4, fixed_abs, tag = 'smem constant byte address 0x4 - core index']
  #allocation1 [shape = 'u32[72,128]{1,0:T(1,128)}', space=vmem, size = 0x9000, scoped, tag = 'internal scratch']
  #allocation2 [shape = 'bf16[128,128]{1,0:T(8,128)(2,1)}', space=vmem, size = 0x8000, scoped, tag = 'scratch operand']
  %s0 = inlined_call_operand.hbm [shape: bf16[128,128], index: 0, kind: input, shape index: {}]
  %s1 = inlined_call_operand.hbm [shape: bf16[128,128], index: 1, kind: input, shape index: {}]
  %s2 = inlined_call_operand.hbm [shape: bf16[128,128], index: 2, kind: input, shape index: {}]
  %s3 = inlined_call_operand.vmem [shape: f32[1,128], index: 3, kind: input, shape index: {}]
  %s4 = inlined_call_operand.hbm [shape: bf16[128,128], index: 4, kind: input, shape index: {}]
  %s5 = inlined_call_operand.vmem [shape: f32[1,128], index: 5, kind: input, shape index: {}]
  %s6 = inlined_call_operand.hbm [shape: f32[128,128], index: 6, kind: output, shape index: {}]
  %s7 = sld [smem:[#allocation0]]
  $region81: #{tpu_custom_call.1} parent=0
    _
  %s9 = ssub.s32 1, %s7
  %s10 = scalar_select 0, %s9, %s7
  $region1: #{tpu_custom_call.1} parent=0
    #allocation3 [shape = 'u8[32768]{0}', space=vmem, size = 0x8000, scoped, tag = 'input window, operand 0, single buffered']
    #allocation4 [shape = 's32[2]{0}', space=sflag, size = 0x8, scoped, tag = 'scoped memory for tpu_custom_call.1']
    #allocation5 [shape = 's32[2]{0}', space=sflag, size = 0x8, scoped, tag = 'scoped memory for tpu_custom_call.1']
    #allocation6 [shape = 'u8[32768]{0}', space=vmem, size = 0x8000, scoped, tag = 'input window, operand 1, single buffered']
    #allocation7 [shape = 's32[1]{0}', space=sflag, size = 0x4, scoped, tag = 'scoped memory for tpu_custom_call.1']
    #allocation8 [shape = 'u8[32768]{0}', space=vmem, size = 0x8000, scoped, tag = 'input window, operand 2, single buffered']
    #allocation9 [shape = 'u8[32768]{0}', space=vmem, size = 0x8000, scoped, tag = 'input window, operand 4, single buffered']
    #allocation10 [shape = 's32[1]{0}', space=sflag, size = 0x4, scoped, tag = 'scoped memory for tpu_custom_call.1']
    #allocation11 [shape = 'u8[65536]{0}', space=vmem, size = 0x10000, scoped, tag = 'output window, operand 0, single buffered']
    %11 = vsyncpa [#allocation4], 0
    %12 = vsyncpa [#allocation7], 0
    %13 = vsyncpa [#allocation10], 0
    %14 = vsyncpa [#allocation5], 0
    loop: start=0, step=1, limit=4
    $region2: #{tpu_custom_call.1} parent=1 // loop_pre_header
      _
    $region3: #{tpu_custom_call.1} parent=1 // loop_header
      %s16 = sphi 0, %s20
      %p17 = scmp.ge.s32.totalorder %s16, 4
      %s23 = sphi 0, %s35
      %s24 = sphi 0, %s31
      %s25 = sphi 0, %s23
      %s26 = sphi 0, %s24
      %s27 = sphi 0, %s25
      %s28 = sphi 0, %s26
      %s38 = sphi 0, %s40
      %s41 = sphi 0, %s38
      %s42 = sphi 0, %s41
      %s58 = sphi 0, %s42
      %s62 = sphi 0, %s62
      %s64 = sphi 0, %s62
      %s65 = sphi 0, %s64
      %s79 = sphi 0, %s65
      %s83 = sphi 0, %s83
      %s85 = sphi 0, %s83
      %s86 = sphi 0, %s85
      %s100 = sphi 0, %s86
      %s104 = sphi 0, %s104
      %s106 = sphi 0, %s104
      %s107 = sphi 0, %s106
      %s121 = sphi 0, %s107
      %s125 = sphi 0, %s125
      %s127 = sphi 0, %s125
      %s128 = sphi 0, %s127
      %s142 = sphi 0, %s128
      %s146 = sphi 0, %s146
      %s148 = sphi 0, %s146
      %s149 = sphi 0, %s148
      %s163 = sphi 0, %s149
      %s169 = sphi 0, %s171
      %s172 = sphi 0, %s169
      %s173 = sphi 0, %s172
      %s189 = sphi 0, %s173
    $region4: #{tpu_custom_call.1} parent=1 // loop_header_branch
      %19 = sbr.rel (%p17) target = $region8
    $region5: #{tpu_custom_call.1} parent=1 // loop_body
      %s21 = ssub.s32 %s16, 1
      %s22 = ssub.s32 %s16, 2
      %s29 = sadd.s32 1, %s24
      %p30 = scmp.ge.s32.totalorder %s29, 1
      %s31 = scalar_select %p30, 0, %s29
      %s32 = sadd.s32 1, %s23
      %s33 = scalar_select %p30, %s32, %s23
      %p34 = scmp.ge.s32.totalorder %s33, 2
      %s35 = scalar_select %p34, 0, %s33
      %s36 = ssub.s32 %s24, %s31
      %p37 = scmp.eq.s32.totalorder %s36, 0
      %s39 = sadd.s32 %s38, 1
      %s40 = scalar_select %p37, %s38, %s39
      %p43 = pneg %p37
      %p44 = scmp.eq.s32.totalorder %s16, 1
      %p45 = por %p43, %p44
      %p46 = scmp.ne.s32.totalorder %s38, %s41
      %p47 = scmp.eq.s32.totalorder %s16, 0
      %p48 = por %p46, %p47
      %p49 = scmp.ne.s32.totalorder %s38, %s41
      %p50 = scmp.eq.s32.totalorder %s21, 1
      %p51 = por %p49, %p50
      %p52 = scmp.ne.s32.totalorder %s41, %s42
      %p53 = scmp.eq.s32.totalorder %s21, 0
      %p54 = por %p52, %p53
      %p55 = scmp.ne.s32.totalorder %s41, %s42
      %p56 = scmp.eq.s32.totalorder %s22, 1
      %p57 = por %p55, %p56
      %p59 = scmp.ne.s32.totalorder %s42, %s58
      %p60 = scmp.eq.s32.totalorder %s22, 0
      %p61 = por %p59, %p60
      %s63 = sadd.s32 %s62, 1
      %p66 = scmp.eq.s32.totalorder %s16, 1
      %p67 = scmp.ne.s32.totalorder %s62, %s64
      %p68 = scmp.eq.s32.totalorder %s16, 0
      %p69 = por %p67, %p68
      %p70 = scmp.ne.s32.totalorder %s62, %s64
      %p71 = scmp.eq.s32.totalorder %s21, 1
      %p72 = por %p70, %p71
      %p73 = scmp.ne.s32.totalorder %s64, %s65
      %p74 = scmp.eq.s32.totalorder %s21, 0
      %p75 = por %p73, %p74
      %p76 = scmp.ne.s32.totalorder %s64, %s65
      %p77 = scmp.eq.s32.totalorder %s22, 1
      %p78 = por %p76, %p77
      %p80 = scmp.ne.s32.totalorder %s65, %s79
      %p81 = scmp.eq.s32.totalorder %s22, 0
      %p82 = por %p80, %p81
      %s84 = sadd.s32 %s83, 1
      %p87 = scmp.eq.s32.totalorder %s16, 1
      %p88 = scmp.ne.s32.totalorder %s83, %s85
      %p89 = scmp.eq.s32.totalorder %s16, 0
      %p90 = por %p88, %p89
      %p91 = scmp.ne.s32.totalorder %s83, %s85
      %p92 = scmp.eq.s32.totalorder %s21, 1
      %p93 = por %p91, %p92
      %p94 = scmp.ne.s32.totalorder %s85, %s86
      %p95 = scmp.eq.s32.totalorder %s21, 0
      %p96 = por %p94, %p95
      %p97 = scmp.ne.s32.totalorder %s85, %s86
      %p98 = scmp.eq.s32.totalorder %s22, 1
      %p99 = por %p97, %p98
      %p101 = scmp.ne.s32.totalorder %s86, %s100
      %p102 = scmp.eq.s32.totalorder %s22, 0
      %p103 = por %p101, %p102
      %s105 = sadd.s32 %s104, 1
      %p108 = scmp.eq.s32.totalorder %s16, 1
      %p109 = scmp.ne.s32.totalorder %s104, %s106
      %p110 = scmp.eq.s32.totalorder %s16, 0
      %p111 = por %p109, %p110
      %p112 = scmp.ne.s32.totalorder %s104, %s106
      %p113 = scmp.eq.s32.totalorder %s21, 1
      %p114 = por %p112, %p113
      %p115 = scmp.ne.s32.totalorder %s106, %s107
      %p116 = scmp.eq.s32.totalorder %s21, 0
      %p117 = por %p115, %p116
      %p118 = scmp.ne.s32.totalorder %s106, %s107
      %p119 = scmp.eq.s32.totalorder %s22, 1
      %p120 = por %p118, %p119
      %p122 = scmp.ne.s32.totalorder %s107, %s121
      %p123 = scmp.eq.s32.totalorder %s22, 0
      %p124 = por %p122, %p123
      %s126 = sadd.s32 %s125, 1
      %p129 = scmp.eq.s32.totalorder %s16, 1
      %p130 = scmp.ne.s32.totalorder %s125, %s127
      %p131 = scmp.eq.s32.totalorder %s16, 0
      %p132 = por %p130, %p131
      %p133 = scmp.ne.s32.totalorder %s125, %s127
      %p134 = scmp.eq.s32.totalorder %s21, 1
      %p135 = por %p133, %p134
      %p136 = scmp.ne.s32.totalorder %s127, %s128
      %p137 = scmp.eq.s32.totalorder %s21, 0
      %p138 = por %p136, %p137
      %p139 = scmp.ne.s32.totalorder %s127, %s128
      %p140 = scmp.eq.s32.totalorder %s22, 1
      %p141 = por %p139, %p140
      %p143 = scmp.ne.s32.totalorder %s128, %s142
      %p144 = scmp.eq.s32.totalorder %s22, 0
      %p145 = por %p143, %p144
      %s147 = sadd.s32 %s146, 1
      %p150 = scmp.eq.s32.totalorder %s16, 1
      %p151 = scmp.ne.s32.totalorder %s146, %s148
      %p152 = scmp.eq.s32.totalorder %s16, 0
      %p153 = por %p151, %p152
      %p154 = scmp.ne.s32.totalorder %s146, %s148
      %p155 = scmp.eq.s32.totalorder %s21, 1
      %p156 = por %p154, %p155
      %p157 = scmp.ne.s32.totalorder %s148, %s149
      %p158 = scmp.eq.s32.totalorder %s21, 0
      %p159 = por %p157, %p158
      %p160 = scmp.ne.s32.totalorder %s148, %s149
      %p161 = scmp.eq.s32.totalorder %s22, 1
      %p162 = por %p160, %p161
      %p164 = scmp.ne.s32.totalorder %s149, %s163
      %p165 = scmp.eq.s32.totalorder %s22, 0
      %p166 = por %p164, %p165
      %s167 = ssub.s32 %s24, %s31
      %p168 = scmp.eq.s32.totalorder %s167, 0
      %s170 = sadd.s32 %s169, 1
      %s171 = scalar_select %p168, %s169, %s170
      %p174 = pneg %p168
      %p175 = scmp.eq.s32.totalorder %s16, 1
      %p176 = por %p174, %p175
      %p177 = scmp.ne.s32.totalorder %s169, %s172
      %p178 = scmp.eq.s32.totalorder %s16, 0
      %p179 = por %p177, %p178
      %p180 = scmp.ne.s32.totalorder %s169, %s172
      %p181 = scmp.eq.s32.totalorder %s21, 1
      %p182 = por %p180, %p181
      %p183 = scmp.ne.s32.totalorder %s172, %s173
      %p184 = scmp.eq.s32.totalorder %s21, 0
      %p185 = por %p183, %p184
      %p186 = scmp.ne.s32.totalorder %s172, %s173
      %p187 = scmp.eq.s32.totalorder %s22, 1
      %p188 = por %p186, %p187
      %p190 = scmp.ne.s32.totalorder %s173, %s189
      %p191 = scmp.eq.s32.totalorder %s22, 0
      %p192 = por %p190, %p191
      %p193 = scmp.le.s32.totalorder 1, %s16
      %p194 = scmp.lt.s32.totalorder %s16, 3
      %p195 = pnand %p193, %p194
      %p196 = pneg %p195
      // Predicated region
      $region9: #{tpu_custom_call.1} parent=5 // pred_check
        _
      $region10: #{tpu_custom_call.1} parent=5 // pred_check_branch
        %198 = sbr.rel (%p195) target = $region12
      $region11: #{tpu_custom_call.1} parent=5 // pred_region
        %s199 = ssub.s32 %s16, 1
        // Predicated region
        $region13: #{tpu_custom_call.1} parent=11 // pred_check
          %p200 = pneg %p54
        $region14: #{tpu_custom_call.1} parent=11 // pred_check_branch
          %202 = sbr.rel (%p200) target = $region16
        $region15: #{tpu_custom_call.1} parent=11 // pred_region
          %s203 = smul.u32 16, %s26
          %205 = vsyncadd [#allocation4], 0
          %s206 = smul.addr %s203, 4
          %s207 = scalar_lea.hbm %s0, %s206
          %s208 = sshll.u32 %s207, 4
          %s209 = int_to_ptr.hbm [resolvable:$true] %s208
          %s210 = sshll.u32 [#allocation3], 4
          %s211 = int_to_ptr.vmem [resolvable:$true] %s210
          %216 = dma.hbm_to_vmem [thread:$0]  %s209, 1024, %s211, [#allocation4], 64, 64, 4
        $region16: #{tpu_custom_call.1} parent=11 // pred_fallthru
          _
        // Predicated region
        $region17: #{tpu_custom_call.1} parent=11 // pred_check
          %p217 = pneg %p75
        $region18: #{tpu_custom_call.1} parent=11 // pred_check_branch
          %219 = sbr.rel (%p217) target = $region20
        $region19: #{tpu_custom_call.1} parent=11 // pred_region
          %221 = vsyncadd [#allocation7], 0
          %s222 = sshll.u32 %s1, 4
          %s223 = int_to_ptr.hbm [resolvable:$true] %s222
          %s224 = sshll.u32 [#allocation6], 4
          %s225 = int_to_ptr.vmem [resolvable:$true] %s224
          %230 = dma.hbm_to_vmem [thread:$0]  %s223, 1024, %s225, [#allocation7], 64, 64, 4
        $region20: #{tpu_custom_call.1} parent=11 // pred_fallthru
          _
        // Predicated region
        $region21: #{tpu_custom_call.1} parent=11 // pred_check
          %p231 = pneg %p96
        $region22: #{tpu_custom_call.1} parent=11 // pred_check_branch
          %233 = sbr.rel (%p231) target = $region24
        $region23: #{tpu_custom_call.1} parent=11 // pred_region
          %235 = vsyncadd [#allocation7], 0
          %s236 = sshll.u32 %s2, 4
          %s237 = int_to_ptr.hbm [resolvable:$true] %s236
          %s238 = sshll.u32 [#allocation8], 4
          %s239 = int_to_ptr.vmem [resolvable:$true] %s238
          %244 = dma.hbm_to_vmem [thread:$0]  %s237, 1024, %s239, [#allocation7], 64, 64, 4
        $region24: #{tpu_custom_call.1} parent=11 // pred_fallthru
          _
        // Predicated region
        $region25: #{tpu_custom_call.1} parent=11 // pred_check
          %p245 = pneg %p117
        $region26: #{tpu_custom_call.1} parent=11 // pred_check_branch
          %247 = sbr.rel (%p245) target = $region28
        $region27: #{tpu_custom_call.1} parent=11 // pred_region
          _
        $region28: #{tpu_custom_call.1} parent=11 // pred_fallthru
          _
        // Predicated region
        $region29: #{tpu_custom_call.1} parent=11 // pred_check
          %p248 = pneg %p138
        $region30: #{tpu_custom_call.1} parent=11 // pred_check_branch
          %250 = sbr.rel (%p248) target = $region32
        $region31: #{tpu_custom_call.1} parent=11 // pred_region
          %252 = vsyncadd [#allocation10], 0
          %s253 = sshll.u32 %s4, 4
          %s254 = int_to_ptr.hbm [resolvable:$true] %s253
          %s255 = sshll.u32 [#allocation9], 4
          %s256 = int_to_ptr.vmem [resolvable:$true] %s255
          %261 = dma.hbm_to_vmem [thread:$0]  %s254, 1024, %s256, [#allocation10], 64, 64, 4
        $region32: #{tpu_custom_call.1} parent=11 // pred_fallthru
          _
        // Predicated region
        $region33: #{tpu_custom_call.1} parent=11 // pred_check
          %p262 = pneg %p159
        $region34: #{tpu_custom_call.1} parent=11 // pred_check_branch
          %264 = sbr.rel (%p262) target = $region36
        $region35: #{tpu_custom_call.1} parent=11 // pred_region
          _
        $region36: #{tpu_custom_call.1} parent=11 // pred_fallthru
          _
      $region12: #{tpu_custom_call.1} parent=5 // pred_fallthru
        _
      %p265 = scmp.lt.s32.totalorder %s16, 2
      // Predicated region
      $region37: #{tpu_custom_call.1} parent=5 // pred_check
        %p266 = pneg %p265
      $region38: #{tpu_custom_call.1} parent=5 // pred_check_branch
        %268 = sbr.rel (%p266) target = $region40
      $region39: #{tpu_custom_call.1} parent=5 // pred_region
        _
      $region40: #{tpu_custom_call.1} parent=5 // pred_fallthru
        _
      %p269 = scmp.le.s32.totalorder 1, %s16
      %p270 = scmp.lt.s32.totalorder %s16, 3
      %p271 = pnand %p269, %p270
      %p272 = pneg %p271
      // Predicated region
      $region41: #{tpu_custom_call.1} parent=5 // pred_check
        _
      $region42: #{tpu_custom_call.1} parent=5 // pred_check_branch
        %274 = sbr.rel (%p271) target = $region44
      $region43: #{tpu_custom_call.1} parent=5 // pred_region
        %s275 = ssub.s32 %s16, 1
        // Predicated region
        $region45: #{tpu_custom_call.1} parent=43 // pred_check
          %p276 = pneg %p54
        $region46: #{tpu_custom_call.1} parent=43 // pred_check_branch
          %278 = sbr.rel (%p276) target = $region48
        $region47: #{tpu_custom_call.1} parent=43 // pred_region
          %280 = dma.done [#allocation4], 1024
        $region48: #{tpu_custom_call.1} parent=43 // pred_fallthru
          _
        // Predicated region
        $region49: #{tpu_custom_call.1} parent=43 // pred_check
          %p281 = pneg %p75
        $region50: #{tpu_custom_call.1} parent=43 // pred_check_branch
          %283 = sbr.rel (%p281) target = $region52
        $region51: #{tpu_custom_call.1} parent=43 // pred_region
          %285 = dma.done [#allocation7], 1024
        $region52: #{tpu_custom_call.1} parent=43 // pred_fallthru
          _
        // Predicated region
        $region53: #{tpu_custom_call.1} parent=43 // pred_check
          %p286 = pneg %p96
        $region54: #{tpu_custom_call.1} parent=43 // pred_check_branch
          %288 = sbr.rel (%p286) target = $region56
        $region55: #{tpu_custom_call.1} parent=43 // pred_region
          %290 = dma.done [#allocation7], 1024
        $region56: #{tpu_custom_call.1} parent=43 // pred_fallthru
          _
        // Predicated region
        $region57: #{tpu_custom_call.1} parent=43 // pred_check
          %p291 = pneg %p138
        $region58: #{tpu_custom_call.1} parent=43 // pred_check_branch
          %293 = sbr.rel (%p291) target = $region60
        $region59: #{tpu_custom_call.1} parent=43 // pred_region
          %295 = dma.done [#allocation10], 1024
        $region60: #{tpu_custom_call.1} parent=43 // pred_fallthru
          _
        %p296 = pneg %p54
        %p297 = pneg %p51
        %p298 = pneg %p75
        %p299 = pneg %p72
        %p300 = pneg %p96
        %p301 = pneg %p93
        %p302 = pneg %p117
        %p303 = pneg %p114
        %p304 = pneg %p138
        %p305 = pneg %p135
        %p306 = pneg %p159
        %p307 = pneg %p156
        %p308 = pneg %p185
        %p309 = pneg %p182
        %s310 = smul.u32 16, %s26
        %s311 = smul.u32 16, %s26
        %p312 = scmp.eq.s32.totalorder %s25, 0
        // Predicated region
        $region61: #{tpu_custom_call.1} parent=43 // pred_check
          %p313 = pneg %p312
        $region62: #{tpu_custom_call.1} parent=43 // pred_check_branch
          %315 = sbr.rel (%p313) target = $region64
        $region63: #{tpu_custom_call.1} parent=43 // pred_region
          %v316 = vld [vmem:[#allocation3] sm:$0xf]
          %v317 = vld [vmem:[#allocation3 + $0x4] sm:$0xf]
          %v318 = vld [vmem:[#allocation3 + $0x8] sm:$0xf]
          %v319 = vld [vmem:[#allocation3 + $0xc] sm:$0xf]
          %v320 = vld [vmem:[#allocation3 + $0x10] sm:$0xf]
          %v321 = vld [vmem:[#allocation3 + $0x14] sm:$0xf]
          %v322 = vld [vmem:[#allocation3 + $0x18] sm:$0xf]
          %v323 = vld [vmem:[#allocation3 + $0x1c] sm:$0xf]
          %v324 = vld [vmem:[#allocation3 + $0x20] sm:$0xf]
          %v325 = vld [vmem:[#allocation3 + $0x24] sm:$0xf]
          %v326 = vld [vmem:[#allocation3 + $0x28] sm:$0xf]
          %v327 = vld [vmem:[#allocation3 + $0x2c] sm:$0xf]
          %v328 = vld [vmem:[#allocation3 + $0x30] sm:$0xf]
          %v329 = vld [vmem:[#allocation3 + $0x34] sm:$0xf]
          %v330 = vld [vmem:[#allocation3 + $0x38] sm:$0xf]
          %v331 = vld [vmem:[#allocation3 + $0x3c] sm:$0xf]
          %v332 = vld [vmem:[#allocation6] sm:$0xf]
          %v333 = vld [vmem:[#allocation6 + $0x4] sm:$0xf]
          %v334 = vld [vmem:[#allocation6 + $0x8] sm:$0xf]
          %v335 = vld [vmem:[#allocation6 + $0xc] sm:$0xf]
          %v336 = vld [vmem:[#allocation6 + $0x10] sm:$0xf]
          %v337 = vld [vmem:[#allocation6 + $0x14] sm:$0xf]
          %v338 = vld [vmem:[#allocation6 + $0x18] sm:$0xf]
          %v339 = vld [vmem:[#allocation6 + $0x1c] sm:$0xf]
          %v340 = vld [vmem:[#allocation6 + $0x20] sm:$0xf]
          %v341 = vld [vmem:[#allocation6 + $0x24] sm:$0xf]
          %v342 = vld [vmem:[#allocation6 + $0x28] sm:$0xf]
          %v343 = vld [vmem:[#allocation6 + $0x2c] sm:$0xf]
          %v344 = vld [vmem:[#allocation6 + $0x30] sm:$0xf]
          %v345 = vld [vmem:[#allocation6 + $0x34] sm:$0xf]
          %v346 = vld [vmem:[#allocation6 + $0x38] sm:$0xf]
          %v347 = vld [vmem:[#allocation6 + $0x3c] sm:$0xf]
          %v364 = vunpack.c.l.b16 %v316
          %v365 = vunpack.c.l.b16 %v317
          %v366 = vunpack.c.l.b16 %v318
          %v367 = vunpack.c.l.b16 %v319
          %v368 = vunpack.c.l.b16 %v320
          %v369 = vunpack.c.l.b16 %v321
          %v370 = vunpack.c.l.b16 %v322
          %v371 = vunpack.c.l.b16 %v323
          %v372 = vunpack.c.l.b16 %v324
          %v373 = vunpack.c.l.b16 %v325
          %v374 = vunpack.c.l.b16 %v326
          %v375 = vunpack.c.l.b16 %v327
          %v376 = vunpack.c.l.b16 %v328
          %v377 = vunpack.c.l.b16 %v329
          %v378 = vunpack.c.l.b16 %v330
          %v379 = vunpack.c.l.b16 %v331
          %v380 = vpack.c.b16 %v365, %v364
          %v381 = vpack.c.b16 %v367, %v366
          %v382 = vpack.c.b16 %v369, %v368
          %v383 = vpack.c.b16 %v371, %v370
          %v384 = vpack.c.b16 %v373, %v372
          %v385 = vpack.c.b16 %v375, %v374
          %v386 = vpack.c.b16 %v377, %v376
          %v387 = vpack.c.b16 %v379, %v378
          %v412 = vunpack.c.l.b16 %v332
          %v413 = vunpack.c.l.b16 %v333
          %v414 = vunpack.c.l.b16 %v334
          %v415 = vunpack.c.l.b16 %v335
          %v416 = vunpack.c.l.b16 %v336
          %v417 = vunpack.c.l.b16 %v337
          %v418 = vunpack.c.l.b16 %v338
          %v419 = vunpack.c.l.b16 %v339
          %v420 = vunpack.c.l.b16 %v340
          %v421 = vunpack.c.l.b16 %v341
          %v422 = vunpack.c.l.b16 %v342
          %v423 = vunpack.c.l.b16 %v343
          %v424 = vunpack.c.l.b16 %v344
          %v425 = vunpack.c.l.b16 %v345
          %v426 = vunpack.c.l.b16 %v346
          %v427 = vunpack.c.l.b16 %v347
          %v428 = vpack.c.b16 %v413, %v412
          %v429 = vpack.c.b16 %v415, %v414
          %v430 = vpack.c.b16 %v417, %v416
          %v431 = vpack.c.b16 %v419, %v418
          %v432 = vpack.c.b16 %v421, %v420
          %v433 = vpack.c.b16 %v423, %v422
          %v434 = vpack.c.b16 %v425, %v424
          %v435 = vpack.c.b16 %v427, %v426
          %444 = vmatpush.bf16.msra.mxu0 %v435
          %445 = vmatpush.bf16.msra.mxu0 %v434
          %446 = vmatpush.bf16.msra.mxu0 %v433
          %447 = vmatpush.bf16.msra.mxu0 %v432
          %448 = vmatpush.bf16.msra.mxu0 %v431
          %449 = vmatpush.bf16.msra.mxu0 %v430
          %450 = vmatpush.bf16.msra.mxu0 %v429
          %451 = vmatpush.bf16.msra.mxu0 %v428
          %452 = vmatmul.bf16.gmra.mxu0 %v380
          %v453 = vpop.f32.mrf.mxu0
          %v454 = vadd.f32 0.0, %v453
          %v455 = vpop.f32.mrf.mxu0
          %v456 = vadd.f32 0.0, %v455
          %457 = vmatmul.bf16.gmra.mxu0 %v381
          %v458 = vpop.f32.mrf.mxu0
          %v459 = vadd.f32 0.0, %v458
          %v460 = vpop.f32.mrf.mxu0
          %v461 = vadd.f32 0.0, %v460
          %462 = vmatmul.bf16.gmra.mxu0 %v382
          %v463 = vpop.f32.mrf.mxu0
          %v464 = vadd.f32 0.0, %v463
          %v465 = vpop.f32.mrf.mxu0
          %v466 = vadd.f32 0.0, %v465
          %467 = vmatmul.bf16.gmra.mxu0 %v383
          %v468 = vpop.f32.mrf.mxu0
          %v469 = vadd.f32 0.0, %v468
          %v470 = vpop.f32.mrf.mxu0
          %v471 = vadd.f32 0.0, %v470
          %472 = vmatmul.bf16.gmra.mxu0 %v384
          %v473 = vpop.f32.mrf.mxu0
          %v474 = vadd.f32 0.0, %v473
          %v475 = vpop.f32.mrf.mxu0
          %v476 = vadd.f32 0.0, %v475
          %477 = vmatmul.bf16.gmra.mxu0 %v385
          %v478 = vpop.f32.mrf.mxu0
          %v479 = vadd.f32 0.0, %v478
          %v480 = vpop.f32.mrf.mxu0
          %v481 = vadd.f32 0.0, %v480
          %482 = vmatmul.bf16.gmra.mxu0 %v386
          %v483 = vpop.f32.mrf.mxu0
          %v484 = vadd.f32 0.0, %v483
          %v485 = vpop.f32.mrf.mxu0
          %v486 = vadd.f32 0.0, %v485
          %487 = vmatmul.bf16.gmra.mxu0 %v387
          %v488 = vpop.f32.mrf.mxu0
          %v489 = vadd.f32 0.0, %v488
          %v490 = vpop.f32.mrf.mxu0
          %v491 = vadd.f32 0.0, %v490
          %492 = vdwg.mxu0
          %v493 = vpack.c.bf16 %v456, %v454
          %v494 = vpack.c.bf16 %v461, %v459
          %v495 = vpack.c.bf16 %v466, %v464
          %v496 = vpack.c.bf16 %v471, %v469
          %v497 = vpack.c.bf16 %v476, %v474
          %v498 = vpack.c.bf16 %v481, %v479
          %v499 = vpack.c.bf16 %v486, %v484
          %v500 = vpack.c.bf16 %v491, %v489
          %v501 = vld [vmem:[#allocation8] sm:$0xf]
          %v502 = vld [vmem:[#allocation8 + $0x4] sm:$0xf]
          %v503 = vld [vmem:[#allocation8 + $0x8] sm:$0xf]
          %v504 = vld [vmem:[#allocation8 + $0xc] sm:$0xf]
          %v505 = vld [vmem:[#allocation8 + $0x10] sm:$0xf]
          %v506 = vld [vmem:[#allocation8 + $0x14] sm:$0xf]
          %v507 = vld [vmem:[#allocation8 + $0x18] sm:$0xf]
          %v508 = vld [vmem:[#allocation8 + $0x1c] sm:$0xf]
          %v509 = vld [vmem:[#allocation8 + $0x20] sm:$0xf]
          %v510 = vld [vmem:[#allocation8 + $0x24] sm:$0xf]
          %v511 = vld [vmem:[#allocation8 + $0x28] sm:$0xf]
          %v512 = vld [vmem:[#allocation8 + $0x2c] sm:$0xf]
          %v513 = vld [vmem:[#allocation8 + $0x30] sm:$0xf]
          %v514 = vld [vmem:[#allocation8 + $0x34] sm:$0xf]
          %v515 = vld [vmem:[#allocation8 + $0x38] sm:$0xf]
          %v516 = vld [vmem:[#allocation8 + $0x3c] sm:$0xf]
          %v517 = vld [vmem:[%s3] sm:$0x1]
          %v519 = vperm.slane %v517, 0
          %v537 = vunpack.c.l.b16 %v501
          %v538 = vunpack.c.l.b16 %v502
          %v539 = vunpack.c.l.b16 %v503
          %v540 = vunpack.c.l.b16 %v504
          %v541 = vunpack.c.l.b16 %v505
          %v542 = vunpack.c.l.b16 %v506
          %v543 = vunpack.c.l.b16 %v507
          %v544 = vunpack.c.l.b16 %v508
          %v545 = vunpack.c.l.b16 %v509
          %v546 = vunpack.c.l.b16 %v510
          %v547 = vunpack.c.l.b16 %v511
          %v548 = vunpack.c.l.b16 %v512
          %v549 = vunpack.c.l.b16 %v513
          %v550 = vunpack.c.l.b16 %v514
          %v551 = vunpack.c.l.b16 %v515
          %v552 = vunpack.c.l.b16 %v516
          %v553 = vpack.c.b16 %v538, %v537
          %v554 = vpack.c.b16 %v540, %v539
          %v555 = vpack.c.b16 %v542, %v541
          %v556 = vpack.c.b16 %v544, %v543
          %v557 = vpack.c.b16 %v546, %v545
          %v558 = vpack.c.b16 %v548, %v547
          %v559 = vpack.c.b16 %v550, %v549
          %v560 = vpack.c.b16 %v552, %v551
          %569 = vmatpush.bf16.msra.mxu0 %v560
          %570 = vmatpush.bf16.msra.mxu0 %v559
          %571 = vmatpush.bf16.msra.mxu0 %v558
          %572 = vmatpush.bf16.msra.mxu0 %v557
          %573 = vmatpush.bf16.msra.mxu0 %v556
          %574 = vmatpush.bf16.msra.mxu0 %v555
          %575 = vmatpush.bf16.msra.mxu0 %v554
          %576 = vmatpush.bf16.msra.mxu0 %v553
          %577 = vmatmul.bf16.gmra.mxu0 %v493
          %v578 = vpop.f32.mrf.mxu0
          %v579 = vadd.f32 %v519, %v578
          %v580 = vpop.f32.mrf.mxu0
          %v581 = vadd.f32 %v519, %v580
          %582 = vmatmul.bf16.gmra.mxu0 %v494
          %v583 = vpop.f32.mrf.mxu0
          %v584 = vadd.f32 %v519, %v583
          %v585 = vpop.f32.mrf.mxu0
          %v586 = vadd.f32 %v519, %v585
          %587 = vmatmul.bf16.gmra.mxu0 %v495
          %v588 = vpop.f32.mrf.mxu0
          %v589 = vadd.f32 %v519, %v588
          %v590 = vpop.f32.mrf.mxu0
          %v591 = vadd.f32 %v519, %v590
          %592 = vmatmul.bf16.gmra.mxu0 %v496
          %v593 = vpop.f32.mrf.mxu0
          %v594 = vadd.f32 %v519, %v593
          %v595 = vpop.f32.mrf.mxu0
          %v596 = vadd.f32 %v519, %v595
          %597 = vmatmul.bf16.gmra.mxu0 %v497
          %v598 = vpop.f32.mrf.mxu0
          %v599 = vadd.f32 %v519, %v598
          %v600 = vpop.f32.mrf.mxu0
          %v601 = vadd.f32 %v519, %v600
          %602 = vmatmul.bf16.gmra.mxu0 %v498
          %v603 = vpop.f32.mrf.mxu0
          %v604 = vadd.f32 %v519, %v603
          %v605 = vpop.f32.mrf.mxu0
          %v606 = vadd.f32 %v519, %v605
          %607 = vmatmul.bf16.gmra.mxu0 %v499
          %v608 = vpop.f32.mrf.mxu0
          %v609 = vadd.f32 %v519, %v608
          %v610 = vpop.f32.mrf.mxu0
          %v611 = vadd.f32 %v519, %v610
          %612 = vmatmul.bf16.gmra.mxu0 %v500
          %v613 = vpop.f32.mrf.mxu0
          %v614 = vadd.f32 %v519, %v613
          %v615 = vpop.f32.mrf.mxu0
          %v616 = vadd.f32 %v519, %v615
          %617 = vdwg.mxu0
          %v618 = vmax.f32 %v579, 0.0
          %v619 = vmax.f32 %v581, 0.0
          %v620 = vmax.f32 %v584, 0.0
          %v621 = vmax.f32 %v586, 0.0
          %v622 = vmax.f32 %v589, 0.0
          %v623 = vmax.f32 %v591, 0.0
          %v624 = vmax.f32 %v594, 0.0
          %v625 = vmax.f32 %v596, 0.0
          %v626 = vmax.f32 %v599, 0.0
          %v627 = vmax.f32 %v601, 0.0
          %v628 = vmax.f32 %v604, 0.0
          %v629 = vmax.f32 %v606, 0.0
          %v630 = vmax.f32 %v609, 0.0
          %v631 = vmax.f32 %v611, 0.0
          %v632 = vmax.f32 %v614, 0.0
          %v633 = vmax.f32 %v616, 0.0
          %s634 = smul.u32 %s26, 128
          %v635 = vpack.c.bf16 %v618, %v618
          %v636 = vpack.c.bf16 %v619, %v619
          %v637 = vpack.c.bf16 %v620, %v620
          %v638 = vpack.c.bf16 %v621, %v621
          %v639 = vpack.c.bf16 %v622, %v622
          %v640 = vpack.c.bf16 %v623, %v623
          %v641 = vpack.c.bf16 %v624, %v624
          %v642 = vpack.c.bf16 %v625, %v625
          %v643 = vpack.c.bf16 %v626, %v626
          %v644 = vpack.c.bf16 %v627, %v627
          %v645 = vpack.c.bf16 %v628, %v628
          %v646 = vpack.c.bf16 %v629, %v629
          %v647 = vpack.c.bf16 %v630, %v630
          %v648 = vpack.c.bf16 %v631, %v631
          %v649 = vpack.c.bf16 %v632, %v632
          %v650 = vpack.c.bf16 %v633, %v633
          %s651 = sshra.s32 %s634, 3
          %s652 = sand.u32 %s634, 7
          %s653 = smul.addr %s651, 4
          %s654 = scalar_lea.vmem [#allocation2], %s653
          %655 = vst [vmem:[%s654] sm:$0xf] %v635
          %656 = vst [vmem:[%s654 + $0x4] sm:$0xf] %v636
          %657 = vst [vmem:[%s654 + $0x8] sm:$0xf] %v637
          %658 = vst [vmem:[%s654 + $0xc] sm:$0xf] %v638
          %659 = vst [vmem:[%s654 + $0x10] sm:$0xf] %v639
          %660 = vst [vmem:[%s654 + $0x14] sm:$0xf] %v640
          %661 = vst [vmem:[%s654 + $0x18] sm:$0xf] %v641
          %662 = vst [vmem:[%s654 + $0x1c] sm:$0xf] %v642
          %663 = vst [vmem:[%s654 + $0x20] sm:$0xf] %v643
          %664 = vst [vmem:[%s654 + $0x24] sm:$0xf] %v644
          %665 = vst [vmem:[%s654 + $0x28] sm:$0xf] %v645
          %666 = vst [vmem:[%s654 + $0x2c] sm:$0xf] %v646
          %667 = vst [vmem:[%s654 + $0x30] sm:$0xf] %v647
          %668 = vst [vmem:[%s654 + $0x34] sm:$0xf] %v648
          %669 = vst [vmem:[%s654 + $0x38] sm:$0xf] %v649
          %670 = vst [vmem:[%s654 + $0x3c] sm:$0xf] %v650
          %671 = vst [vmem:[#allocation11] sm:$0xff] 0.0
          %672 = vst [vmem:[#allocation11 + $0x8] sm:$0xff] 0.0
          %673 = vst [vmem:[#allocation11 + $0x10] sm:$0xff] 0.0
          %674 = vst [vmem:[#allocation11 + $0x18] sm:$0xff] 0.0
          %675 = vst [vmem:[#allocation11 + $0x20] sm:$0xff] 0.0
          %676 = vst [vmem:[#allocation11 + $0x28] sm:$0xff] 0.0
          %677 = vst [vmem:[#allocation11 + $0x30] sm:$0xff] 0.0
          %678 = vst [vmem:[#allocation11 + $0x38] sm:$0xff] 0.0
          %679 = vst [vmem:[#allocation11 + $0x40] sm:$0xff] 0.0
          %680 = vst [vmem:[#allocation11 + $0x48] sm:$0xff] 0.0
          %681 = vst [vmem:[#allocation11 + $0x50] sm:$0xff] 0.0
          %682 = vst [vmem:[#allocation11 + $0x58] sm:$0xff] 0.0
          %683 = vst [vmem:[#allocation11 + $0x60] sm:$0xff] 0.0
          %684 = vst [vmem:[#allocation11 + $0x68] sm:$0xff] 0.0
          %685 = vst [vmem:[#allocation11 + $0x70] sm:$0xff] 0.0
          %686 = vst [vmem:[#allocation11 + $0x78] sm:$0xff] 0.0
        $region64: #{tpu_custom_call.1} parent=43 // pred_fallthru
          _
        %p687 = scmp.eq.s32.totalorder %s25, 1
        // Predicated region
        $region65: #{tpu_custom_call.1} parent=43 // pred_check
          %p688 = pneg %p687
        $region66: #{tpu_custom_call.1} parent=43 // pred_check_branch
          %690 = sbr.rel (%p688) target = $region68
        $region67: #{tpu_custom_call.1} parent=43 // pred_region
          %v691 = vld [vmem:[#allocation3] sm:$0xf]
          %v692 = vld [vmem:[#allocation3 + $0x4] sm:$0xf]
          %v693 = vld [vmem:[#allocation3 + $0x8] sm:$0xf]
          %v694 = vld [vmem:[#allocation3 + $0xc] sm:$0xf]
          %v695 = vld [vmem:[#allocation3 + $0x10] sm:$0xf]
          %v696 = vld [vmem:[#allocation3 + $0x14] sm:$0xf]
          %v697 = vld [vmem:[#allocation3 + $0x18] sm:$0xf]
          %v698 = vld [vmem:[#allocation3 + $0x1c] sm:$0xf]
          %v699 = vld [vmem:[#allocation3 + $0x20] sm:$0xf]
          %v700 = vld [vmem:[#allocation3 + $0x24] sm:$0xf]
          %v701 = vld [vmem:[#allocation3 + $0x28] sm:$0xf]
          %v702 = vld [vmem:[#allocation3 + $0x2c] sm:$0xf]
          %v703 = vld [vmem:[#allocation3 + $0x30] sm:$0xf]
          %v704 = vld [vmem:[#allocation3 + $0x34] sm:$0xf]
          %v705 = vld [vmem:[#allocation3 + $0x38] sm:$0xf]
          %v706 = vld [vmem:[#allocation3 + $0x3c] sm:$0xf]
          %v707 = vld [vmem:[#allocation2] sm:$0xf]
          %v708 = vld [vmem:[#allocation2 + $0x4] sm:$0xf]
          %v709 = vld [vmem:[#allocation2 + $0x8] sm:$0xf]
          %v710 = vld [vmem:[#allocation2 + $0xc] sm:$0xf]
          %v711 = vld [vmem:[#allocation2 + $0x10] sm:$0xf]
          %v712 = vld [vmem:[#allocation2 + $0x14] sm:$0xf]
          %v713 = vld [vmem:[#allocation2 + $0x18] sm:$0xf]
          %v714 = vld [vmem:[#allocation2 + $0x1c] sm:$0xf]
          %v715 = vld [vmem:[#allocation2 + $0x20] sm:$0xf]
          %v716 = vld [vmem:[#allocation2 + $0x24] sm:$0xf]
          %v717 = vld [vmem:[#allocation2 + $0x28] sm:$0xf]
          %v718 = vld [vmem:[#allocation2 + $0x2c] sm:$0xf]
          %v719 = vld [vmem:[#allocation2 + $0x30] sm:$0xf]
          %v720 = vld [vmem:[#allocation2 + $0x34] sm:$0xf]
          %v721 = vld [vmem:[#allocation2 + $0x38] sm:$0xf]
          %v722 = vld [vmem:[#allocation2 + $0x3c] sm:$0xf]
          %v739 = vunpack.c.l.b16 %v691
          %v740 = vunpack.c.l.b16 %v692
          %v741 = vunpack.c.l.b16 %v693
          %v742 = vunpack.c.l.b16 %v694
          %v743 = vunpack.c.l.b16 %v695
          %v744 = vunpack.c.l.b16 %v696
          %v745 = vunpack.c.l.b16 %v697
          %v746 = vunpack.c.l.b16 %v698
          %v747 = vunpack.c.l.b16 %v699
          %v748 = vunpack.c.l.b16 %v700
          %v749 = vunpack.c.l.b16 %v701
          %v750 = vunpack.c.l.b16 %v702
          %v751 = vunpack.c.l.b16 %v703
          %v752 = vunpack.c.l.b16 %v704
          %v753 = vunpack.c.l.b16 %v705
          %v754 = vunpack.c.l.b16 %v706
          %v755 = vpack.c.b16 %v740, %v739
          %v756 = vpack.c.b16 %v742, %v741
          %v757 = vpack.c.b16 %v744, %v743
          %v758 = vpack.c.b16 %v746, %v745
          %v759 = vpack.c.b16 %v748, %v747
          %v760 = vpack.c.b16 %v750, %v749
          %v761 = vpack.c.b16 %v752, %v751
          %v762 = vpack.c.b16 %v754, %v753
          %v787 = vunpack.c.l.b16 %v707
          %v788 = vunpack.c.l.b16 %v708
          %v789 = vunpack.c.l.b16 %v709
          %v790 = vunpack.c.l.b16 %v710
          %v791 = vunpack.c.l.b16 %v711
          %v792 = vunpack.c.l.b16 %v712
          %v793 = vunpack.c.l.b16 %v713
          %v794 = vunpack.c.l.b16 %v714
          %v795 = vunpack.c.l.b16 %v715
          %v796 = vunpack.c.l.b16 %v716
          %v797 = vunpack.c.l.b16 %v717
          %v798 = vunpack.c.l.b16 %v718
          %v799 = vunpack.c.l.b16 %v719
          %v800 = vunpack.c.l.b16 %v720
          %v801 = vunpack.c.l.b16 %v721
          %v802 = vunpack.c.l.b16 %v722
          %v803 = vpack.c.b16 %v788, %v787
          %v804 = vpack.c.b16 %v790, %v789
          %v805 = vpack.c.b16 %v792, %v791
          %v806 = vpack.c.b16 %v794, %v793
          %v807 = vpack.c.b16 %v796, %v795
          %v808 = vpack.c.b16 %v798, %v797
          %v809 = vpack.c.b16 %v800, %v799
          %v810 = vpack.c.b16 %v802, %v801
          %819 = vmatpush.bf16.msra.mxu0 %v810
          %820 = vmatpush.bf16.msra.mxu0 %v809
          %821 = vmatpush.bf16.msra.mxu0 %v808
          %822 = vmatpush.bf16.msra.mxu0 %v807
          %823 = vmatpush.bf16.msra.mxu0 %v806
          %824 = vmatpush.bf16.msra.mxu0 %v805
          %825 = vmatpush.bf16.msra.mxu0 %v804
          %826 = vmatpush.bf16.msra.mxu0 %v803
          %827 = vmatmul.bf16.gmra.mxu0 %v755
          %v828 = vpop.f32.mrf.mxu0
          %v829 = vadd.f32 0.0, %v828
          %v830 = vpop.f32.mrf.mxu0
          %v831 = vadd.f32 0.0, %v830
          %832 = vmatmul.bf16.gmra.mxu0 %v756
          %v833 = vpop.f32.mrf.mxu0
          %v834 = vadd.f32 0.0, %v833
          %v835 = vpop.f32.mrf.mxu0
          %v836 = vadd.f32 0.0, %v835
          %837 = vmatmul.bf16.gmra.mxu0 %v757
          %v838 = vpop.f32.mrf.mxu0
          %v839 = vadd.f32 0.0, %v838
          %v840 = vpop.f32.mrf.mxu0
          %v841 = vadd.f32 0.0, %v840
          %842 = vmatmul.bf16.gmra.mxu0 %v758
          %v843 = vpop.f32.mrf.mxu0
          %v844 = vadd.f32 0.0, %v843
          %v845 = vpop.f32.mrf.mxu0
          %v846 = vadd.f32 0.0, %v845
          %847 = vmatmul.bf16.gmra.mxu0 %v759
          %v848 = vpop.f32.mrf.mxu0
          %v849 = vadd.f32 0.0, %v848
          %v850 = vpop.f32.mrf.mxu0
          %v851 = vadd.f32 0.0, %v850
          %852 = vmatmul.bf16.gmra.mxu0 %v760
          %v853 = vpop.f32.mrf.mxu0
          %v854 = vadd.f32 0.0, %v853
          %v855 = vpop.f32.mrf.mxu0
          %v856 = vadd.f32 0.0, %v855
          %857 = vmatmul.bf16.gmra.mxu0 %v761
          %v858 = vpop.f32.mrf.mxu0
          %v859 = vadd.f32 0.0, %v858
          %v860 = vpop.f32.mrf.mxu0
          %v861 = vadd.f32 0.0, %v860
          %862 = vmatmul.bf16.gmra.mxu0 %v762
          %v863 = vpop.f32.mrf.mxu0
          %v864 = vadd.f32 0.0, %v863
          %v865 = vpop.f32.mrf.mxu0
          %v866 = vadd.f32 0.0, %v865
          %867 = vdwg.mxu0
          %v868 = vpack.c.bf16 %v831, %v829
          %v869 = vpack.c.bf16 %v836, %v834
          %v870 = vpack.c.bf16 %v841, %v839
          %v871 = vpack.c.bf16 %v846, %v844
          %v872 = vpack.c.bf16 %v851, %v849
          %v873 = vpack.c.bf16 %v856, %v854
          %v874 = vpack.c.bf16 %v861, %v859
          %v875 = vpack.c.bf16 %v866, %v864
          %v876 = vld [vmem:[#allocation9] sm:$0xf]
          %v877 = vld [vmem:[#allocation9 + $0x4] sm:$0xf]
          %v878 = vld [vmem:[#allocation9 + $0x8] sm:$0xf]
          %v879 = vld [vmem:[#allocation9 + $0xc] sm:$0xf]
          %v880 = vld [vmem:[#allocation9 + $0x10] sm:$0xf]
          %v881 = vld [vmem:[#allocation9 + $0x14] sm:$0xf]
          %v882 = vld [vmem:[#allocation9 + $0x18] sm:$0xf]
          %v883 = vld [vmem:[#allocation9 + $0x1c] sm:$0xf]
          %v884 = vld [vmem:[#allocation9 + $0x20] sm:$0xf]
          %v885 = vld [vmem:[#allocation9 + $0x24] sm:$0xf]
          %v886 = vld [vmem:[#allocation9 + $0x28] sm:$0xf]
          %v887 = vld [vmem:[#allocation9 + $0x2c] sm:$0xf]
          %v888 = vld [vmem:[#allocation9 + $0x30] sm:$0xf]
          %v889 = vld [vmem:[#allocation9 + $0x34] sm:$0xf]
          %v890 = vld [vmem:[#allocation9 + $0x38] sm:$0xf]
          %v891 = vld [vmem:[#allocation9 + $0x3c] sm:$0xf]
          %v892 = vld [vmem:[%s5] sm:$0x1]
          %v894 = vperm.slane %v892, 0
          %v912 = vunpack.c.l.b16 %v876
          %v913 = vunpack.c.l.b16 %v877
          %v914 = vunpack.c.l.b16 %v878
          %v915 = vunpack.c.l.b16 %v879
          %v916 = vunpack.c.l.b16 %v880
          %v917 = vunpack.c.l.b16 %v881
          %v918 = vunpack.c.l.b16 %v882
          %v919 = vunpack.c.l.b16 %v883
          %v920 = vunpack.c.l.b16 %v884
          %v921 = vunpack.c.l.b16 %v885
          %v922 = vunpack.c.l.b16 %v886
          %v923 = vunpack.c.l.b16 %v887
          %v924 = vunpack.c.l.b16 %v888
          %v925 = vunpack.c.l.b16 %v889
          %v926 = vunpack.c.l.b16 %v890
          %v927 = vunpack.c.l.b16 %v891
          %v928 = vpack.c.b16 %v913, %v912
          %v929 = vpack.c.b16 %v915, %v914
          %v930 = vpack.c.b16 %v917, %v916
          %v931 = vpack.c.b16 %v919, %v918
          %v932 = vpack.c.b16 %v921, %v920
          %v933 = vpack.c.b16 %v923, %v922
          %v934 = vpack.c.b16 %v925, %v924
          %v935 = vpack.c.b16 %v927, %v926
          %944 = vmatpush.bf16.msra.mxu0 %v935
          %945 = vmatpush.bf16.msra.mxu0 %v934
          %946 = vmatpush.bf16.msra.mxu0 %v933
          %947 = vmatpush.bf16.msra.mxu0 %v932
          %948 = vmatpush.bf16.msra.mxu0 %v931
          %949 = vmatpush.bf16.msra.mxu0 %v930
          %950 = vmatpush.bf16.msra.mxu0 %v929
          %951 = vmatpush.bf16.msra.mxu0 %v928
          %952 = vmatmul.bf16.gmra.mxu0 %v868
          %v953 = vpop.f32.mrf.mxu0
          %v954 = vadd.f32 %v894, %v953
          %v955 = vpop.f32.mrf.mxu0
          %v956 = vadd.f32 %v894, %v955
          %957 = vmatmul.bf16.gmra.mxu0 %v869
          %v958 = vpop.f32.mrf.mxu0
          %v959 = vadd.f32 %v894, %v958
          %v960 = vpop.f32.mrf.mxu0
          %v961 = vadd.f32 %v894, %v960
          %962 = vmatmul.bf16.gmra.mxu0 %v870
          %v963 = vpop.f32.mrf.mxu0
          %v964 = vadd.f32 %v894, %v963
          %v965 = vpop.f32.mrf.mxu0
          %v966 = vadd.f32 %v894, %v965
          %967 = vmatmul.bf16.gmra.mxu0 %v871
          %v968 = vpop.f32.mrf.mxu0
          %v969 = vadd.f32 %v894, %v968
          %v970 = vpop.f32.mrf.mxu0
          %v971 = vadd.f32 %v894, %v970
          %972 = vmatmul.bf16.gmra.mxu0 %v872
          %v973 = vpop.f32.mrf.mxu0
          %v974 = vadd.f32 %v894, %v973
          %v975 = vpop.f32.mrf.mxu0
          %v976 = vadd.f32 %v894, %v975
          %977 = vmatmul.bf16.gmra.mxu0 %v873
          %v978 = vpop.f32.mrf.mxu0
          %v979 = vadd.f32 %v894, %v978
          %v980 = vpop.f32.mrf.mxu0
          %v981 = vadd.f32 %v894, %v980
          %982 = vmatmul.bf16.gmra.mxu0 %v874
          %v983 = vpop.f32.mrf.mxu0
          %v984 = vadd.f32 %v894, %v983
          %v985 = vpop.f32.mrf.mxu0
          %v986 = vadd.f32 %v894, %v985
          %987 = vmatmul.bf16.gmra.mxu0 %v875
          %v988 = vpop.f32.mrf.mxu0
          %v989 = vadd.f32 %v894, %v988
          %v990 = vpop.f32.mrf.mxu0
          %v991 = vadd.f32 %v894, %v990
          %992 = vdwg.mxu0
          %993 = vst [vmem:[#allocation11] sm:$0xff] %v954
          %994 = vst [vmem:[#allocation11 + $0x8] sm:$0xff] %v956
          %995 = vst [vmem:[#allocation11 + $0x10] sm:$0xff] %v959
          %996 = vst [vmem:[#allocation11 + $0x18] sm:$0xff] %v961
          %997 = vst [vmem:[#allocation11 + $0x20] sm:$0xff] %v964
          %998 = vst [vmem:[#allocation11 + $0x28] sm:$0xff] %v966
          %999 = vst [vmem:[#allocation11 + $0x30] sm:$0xff] %v969
          %1000 = vst [vmem:[#allocation11 + $0x38] sm:$0xff] %v971
          %1001 = vst [vmem:[#allocation11 + $0x40] sm:$0xff] %v974
          %1002 = vst [vmem:[#allocation11 + $0x48] sm:$0xff] %v976
          %1003 = vst [vmem:[#allocation11 + $0x50] sm:$0xff] %v979
          %1004 = vst [vmem:[#allocation11 + $0x58] sm:$0xff] %v981
          %1005 = vst [vmem:[#allocation11 + $0x60] sm:$0xff] %v984
          %1006 = vst [vmem:[#allocation11 + $0x68] sm:$0xff] %v986
          %1007 = vst [vmem:[#allocation11 + $0x70] sm:$0xff] %v989
          %1008 = vst [vmem:[#allocation11 + $0x78] sm:$0xff] %v991
        $region68: #{tpu_custom_call.1} parent=43 // pred_fallthru
          _
        // Predicated region
        $region69: #{tpu_custom_call.1} parent=43 // pred_check
          %p1009 = pneg %p182
        $region70: #{tpu_custom_call.1} parent=43 // pred_check_branch
          %1011 = sbr.rel (%p1009) target = $region72
        $region71: #{tpu_custom_call.1} parent=43 // pred_region
          %s1012 = smul.u32 16, %s26
          %1014 = vsyncadd [#allocation5], 0
          %s1015 = smul.addr %s1012, 8
          %s1016 = scalar_lea.hbm %s6, %s1015
          %s1017 = sshll.u32 [#allocation11], 4
          %s1018 = int_to_ptr.vmem [resolvable:$true] %s1017
          %s1019 = sshll.u32 %s1016, 4
          %s1020 = int_to_ptr.hbm [resolvable:$true] %s1019
          %1025 = dma.vmem_to_hbm [thread:$0]  %s1018, 2048, %s1020, [#allocation5], 128, 128, 8
        $region72: #{tpu_custom_call.1} parent=43 // pred_fallthru
          _
        // Predicated region
        $region73: #{tpu_custom_call.1} parent=43 // pred_check
          %p1026 = pneg %p182
        $region74: #{tpu_custom_call.1} parent=43 // pred_check_branch
          %1028 = sbr.rel (%p1026) target = $region76
        $region75: #{tpu_custom_call.1} parent=43 // pred_region
          %1030 = dma.done [#allocation5], 2048
        $region76: #{tpu_custom_call.1} parent=43 // pred_fallthru
          _
      $region44: #{tpu_custom_call.1} parent=5 // pred_fallthru
        _
      %p1031 = scmp.le.s32.totalorder 2, %s16
      // Predicated region
      $region77: #{tpu_custom_call.1} parent=5 // pred_check
        %p1032 = pneg %p1031
      $region78: #{tpu_custom_call.1} parent=5 // pred_check_branch
        %1034 = sbr.rel (%p1032) target = $region80
      $region79: #{tpu_custom_call.1} parent=5 // pred_region
        %s1035 = ssub.s32 %s16, 2
      $region80: #{tpu_custom_call.1} parent=5 // pred_fallthru
        _
    $region6: #{tpu_custom_call.1} parent=1 // loop_footer
      %s20 = sadd.s32 1, %s16
    $region7: #{tpu_custom_call.1} parent=1 // loop_footer_branch
      %15 = sbr.rel target = $region3
    $region8: #{tpu_custom_call.1} parent=1 // loop_exit
      _
    %1036 = vsyncpa [#allocation4], 1
    %s1037 = scalar_lea.sflag [#allocation4], 1
    %1038 = vsyncpa %s1037, 1
    %1039 = vsyncpa [#allocation7], 1
    %1040 = vsyncpa [#allocation10], 1
    %1041 = vsyncpa [#allocation5], 1
    %s1042 = scalar_lea.sflag [#allocation5], 1
    %1043 = vsyncpa %s1042, 1

// kernel: tpu_custom_call.1
$region0: #{tpu_custom_call.1}
  #allocation0 [shape = 'u32[]', space=smem, size = 0x4, offset = 0x4, fixed_abs, tag = 'smem constant byte address 0x4 - core index']
  #allocation1 [shape = 'u32[72,128]{1,0:T(1,128)}', space=vmem, size = 0x9000, scoped, tag = 'internal scratch']
  #allocation2 [shape = 'bf16[128,128]{1,0:T(8,128)(2,1)}', space=vmem, size = 0x8000, scoped, tag = 'scratch operand']
  %s0 = inlined_call_operand.hbm [shape: bf16[128,128], index: 0, kind: input, shape index: {}]
  %s1 = inlined_call_operand.hbm [shape: bf16[128,128], index: 1, kind: input, shape index: {}]
  %s2 = inlined_call_operand.hbm [shape: bf16[128,128], index: 2, kind: input, shape index: {}]
  %s3 = inlined_call_operand.vmem [shape: f32[1,128], index: 3, kind: input, shape index: {}]
  %s4 = inlined_call_operand.hbm [shape: bf16[128,128], index: 4, kind: input, shape index: {}]
  %s5 = inlined_call_operand.vmem [shape: f32[1,128], index: 5, kind: input, shape index: {}]
  %s6 = inlined_call_operand.hbm [shape: f32[128,128], index: 6, kind: output, shape index: {}]
  %s7 = sld [smem:[#allocation0]]
  $region81: #{tpu_custom_call.1} parent=0
    _
  %s9 = ssub.s32 1, %s7
  %s10 = scalar_select 0, %s9, %s7
  $region1: #{tpu_custom_call.1} parent=0
    #allocation3 [shape = 'u8[32768]{0}', space=vmem, size = 0x8000, scoped, tag = 'input window, operand 0, single buffered']
    #allocation4 [shape = 's32[2]{0}', space=sflag, size = 0x8, scoped, tag = 'scoped memory for tpu_custom_call.1']
    #allocation5 [shape = 's32[2]{0}', space=sflag, size = 0x8, scoped, tag = 'scoped memory for tpu_custom_call.1']
    #allocation6 [shape = 'u8[32768]{0}', space=vmem, size = 0x8000, scoped, tag = 'input window, operand 1, single buffered']
    #allocation7 [shape = 's32[1]{0}', space=sflag, size = 0x4, scoped, tag = 'scoped memory for tpu_custom_call.1']
    #allocation8 [shape = 'u8[32768]{0}', space=vmem, size = 0x8000, scoped, tag = 'input window, operand 2, single buffered']
    #allocation9 [shape = 'u8[32768]{0}', space=vmem, size = 0x8000, scoped, tag = 'input window, operand 4, single buffered']
    #allocation10 [shape = 's32[1]{0}', space=sflag, size = 0x4, scoped, tag = 'scoped memory for tpu_custom_call.1']
    #allocation11 [shape = 'u8[65536]{0}', space=vmem, size = 0x10000, scoped, tag = 'output window, operand 0, single buffered']
    %11 = vsyncpa [#allocation4], 0
    %12 = vsyncpa [#allocation7], 0
    %13 = vsyncpa [#allocation10], 0
    %14 = vsyncpa [#allocation5], 0
    loop: start=0, step=1, limit=4
    $region2: #{tpu_custom_call.1} parent=1 // loop_pre_header
      _
    $region3: #{tpu_custom_call.1} parent=1 // loop_header
      %s16 = sphi 0, %s20
      %p17 = scmp.ge.s32.totalorder %s16, 4
      %s23 = sphi 0, %s35
      %s24 = sphi 0, %s31
      %s25 = sphi 0, %s23
      %s26 = sphi 0, %s24
      %s27 = sphi 0, %s25
      %s28 = sphi 0, %s26
      %s38 = sphi 0, %s40
      %s41 = sphi 0, %s38
      %s42 = sphi 0, %s41
      %s58 = sphi 0, %s42
      %s62 = sphi 0, %s62
      %s64 = sphi 0, %s62
      %s65 = sphi 0, %s64
      %s79 = sphi 0, %s65
      %s83 = sphi 0, %s83
      %s85 = sphi 0, %s83
      %s86 = sphi 0, %s85
      %s100 = sphi 0, %s86
      %s104 = sphi 0, %s104
      %s106 = sphi 0, %s104
      %s107 = sphi 0, %s106
      %s121 = sphi 0, %s107
      %s125 = sphi 0, %s125
      %s127 = sphi 0, %s125
      %s128 = sphi 0, %s127
      %s142 = sphi 0, %s128
      %s146 = sphi 0, %s146
      %s148 = sphi 0, %s146
      %s149 = sphi 0, %s148
      %s163 = sphi 0, %s149
      %s169 = sphi 0, %s171
      %s172 = sphi 0, %s169
      %s173 = sphi 0, %s172
      %s189 = sphi 0, %s173
    $region4: #{tpu_custom_call.1} parent=1 // loop_header_branch
      %19 = sbr.rel (%p17) target = $region8
    $region5: #{tpu_custom_call.1} parent=1 // loop_body
      %s21 = ssub.s32 %s16, 1
      %s22 = ssub.s32 %s16, 2
      %s29 = sadd.s32 1, %s24
      %p30 = scmp.ge.s32.totalorder %s29, 1
      %s31 = scalar_select %p30, 0, %s29
      %s32 = sadd.s32 1, %s23
      %s33 = scalar_select %p30, %s32, %s23
      %p34 = scmp.ge.s32.totalorder %s33, 2
      %s35 = scalar_select %p34, 0, %s33
      %s36 = ssub.s32 %s24, %s31
      %p37 = scmp.eq.s32.totalorder %s36, 0
      %s39 = sadd.s32 %s38, 1
      %s40 = scalar_select %p37, %s38, %s39
      %p43 = pneg %p37
      %p44 = scmp.eq.s32.totalorder %s16, 1
      %p45 = por %p43, %p44
      %p46 = scmp.ne.s32.totalorder %s38, %s41
      %p47 = scmp.eq.s32.totalorder %s16, 0
      %p48 = por %p46, %p47
      %p49 = scmp.ne.s32.totalorder %s38, %s41
      %p50 = scmp.eq.s32.totalorder %s21, 1
      %p51 = por %p49, %p50
      %p52 = scmp.ne.s32.totalorder %s41, %s42
      %p53 = scmp.eq.s32.totalorder %s21, 0
      %p54 = por %p52, %p53
      %p55 = scmp.ne.s32.totalorder %s41, %s42
      %p56 = scmp.eq.s32.totalorder %s22, 1
      %p57 = por %p55, %p56
      %p59 = scmp.ne.s32.totalorder %s42, %s58
      %p60 = scmp.eq.s32.totalorder %s22, 0
      %p61 = por %p59, %p60
      %s63 = sadd.s32 %s62, 1
      %p66 = scmp.eq.s32.totalorder %s16, 1
      %p67 = scmp.ne.s32.totalorder %s62, %s64
      %p68 = scmp.eq.s32.totalorder %s16, 0
      %p69 = por %p67, %p68
      %p70 = scmp.ne.s32.totalorder %s62, %s64
      %p71 = scmp.eq.s32.totalorder %s21, 1
      %p72 = por %p70, %p71
      %p73 = scmp.ne.s32.totalorder %s64, %s65
      %p74 = scmp.eq.s32.totalorder %s21, 0
      %p75 = por %p73, %p74
      %p76 = scmp.ne.s32.totalorder %s64, %s65
      %p77 = scmp.eq.s32.totalorder %s22, 1
      %p78 = por %p76, %p77
      %p80 = scmp.ne.s32.totalorder %s65, %s79
      %p81 = scmp.eq.s32.totalorder %s22, 0
      %p82 = por %p80, %p81
      %s84 = sadd.s32 %s83, 1
      %p87 = scmp.eq.s32.totalorder %s16, 1
      %p88 = scmp.ne.s32.totalorder %s83, %s85
      %p89 = scmp.eq.s32.totalorder %s16, 0
      %p90 = por %p88, %p89
      %p91 = scmp.ne.s32.totalorder %s83, %s85
      %p92 = scmp.eq.s32.totalorder %s21, 1
      %p93 = por %p91, %p92
      %p94 = scmp.ne.s32.totalorder %s85, %s86
      %p95 = scmp.eq.s32.totalorder %s21, 0
      %p96 = por %p94, %p95
      %p97 = scmp.ne.s32.totalorder %s85, %s86
      %p98 = scmp.eq.s32.totalorder %s22, 1
      %p99 = por %p97, %p98
      %p101 = scmp.ne.s32.totalorder %s86, %s100
      %p102 = scmp.eq.s32.totalorder %s22, 0
      %p103 = por %p101, %p102
      %s105 = sadd.s32 %s104, 1
      %p108 = scmp.eq.s32.totalorder %s16, 1
      %p109 = scmp.ne.s32.totalorder %s104, %s106
      %p110 = scmp.eq.s32.totalorder %s16, 0
      %p111 = por %p109, %p110
      %p112 = scmp.ne.s32.totalorder %s104, %s106
      %p113 = scmp.eq.s32.totalorder %s21, 1
      %p114 = por %p112, %p113
      %p115 = scmp.ne.s32.totalorder %s106, %s107
      %p116 = scmp.eq.s32.totalorder %s21, 0
      %p117 = por %p115, %p116
      %p118 = scmp.ne.s32.totalorder %s106, %s107
      %p119 = scmp.eq.s32.totalorder %s22, 1
      %p120 = por %p118, %p119
      %p122 = scmp.ne.s32.totalorder %s107, %s121
      %p123 = scmp.eq.s32.totalorder %s22, 0
      %p124 = por %p122, %p123
      %s126 = sadd.s32 %s125, 1
      %p129 = scmp.eq.s32.totalorder %s16, 1
      %p130 = scmp.ne.s32.totalorder %s125, %s127
      %p131 = scmp.eq.s32.totalorder %s16, 0
      %p132 = por %p130, %p131
      %p133 = scmp.ne.s32.totalorder %s125, %s127
      %p134 = scmp.eq.s32.totalorder %s21, 1
      %p135 = por %p133, %p134
      %p136 = scmp.ne.s32.totalorder %s127, %s128
      %p137 = scmp.eq.s32.totalorder %s21, 0
      %p138 = por %p136, %p137
      %p139 = scmp.ne.s32.totalorder %s127, %s128
      %p140 = scmp.eq.s32.totalorder %s22, 1
      %p141 = por %p139, %p140
      %p143 = scmp.ne.s32.totalorder %s128, %s142
      %p144 = scmp.eq.s32.totalorder %s22, 0
      %p145 = por %p143, %p144
      %s147 = sadd.s32 %s146, 1
      %p150 = scmp.eq.s32.totalorder %s16, 1
      %p151 = scmp.ne.s32.totalorder %s146, %s148
      %p152 = scmp.eq.s32.totalorder %s16, 0
      %p153 = por %p151, %p152
      %p154 = scmp.ne.s32.totalorder %s146, %s148
      %p155 = scmp.eq.s32.totalorder %s21, 1
      %p156 = por %p154, %p155
      %p157 = scmp.ne.s32.totalorder %s148, %s149
      %p158 = scmp.eq.s32.totalorder %s21, 0
      %p159 = por %p157, %p158
      %p160 = scmp.ne.s32.totalorder %s148, %s149
      %p161 = scmp.eq.s32.totalorder %s22, 1
      %p162 = por %p160, %p161
      %p164 = scmp.ne.s32.totalorder %s149, %s163
      %p165 = scmp.eq.s32.totalorder %s22, 0
      %p166 = por %p164, %p165
      %s167 = ssub.s32 %s24, %s31
      %p168 = scmp.eq.s32.totalorder %s167, 0
      %s170 = sadd.s32 %s169, 1
      %s171 = scalar_select %p168, %s169, %s170
      %p174 = pneg %p168
      %p175 = scmp.eq.s32.totalorder %s16, 1
      %p176 = por %p174, %p175
      %p177 = scmp.ne.s32.totalorder %s169, %s172
      %p178 = scmp.eq.s32.totalorder %s16, 0
      %p179 = por %p177, %p178
      %p180 = scmp.ne.s32.totalorder %s169, %s172
      %p181 = scmp.eq.s32.totalorder %s21, 1
      %p182 = por %p180, %p181
      %p183 = scmp.ne.s32.totalorder %s172, %s173
      %p184 = scmp.eq.s32.totalorder %s21, 0
      %p185 = por %p183, %p184
      %p186 = scmp.ne.s32.totalorder %s172, %s173
      %p187 = scmp.eq.s32.totalorder %s22, 1
      %p188 = por %p186, %p187
      %p190 = scmp.ne.s32.totalorder %s173, %s189
      %p191 = scmp.eq.s32.totalorder %s22, 0
      %p192 = por %p190, %p191
      %p193 = scmp.le.s32.totalorder 1, %s16
      %p194 = scmp.lt.s32.totalorder %s16, 3
      %p195 = pnand %p193, %p194
      %p196 = pneg %p195
      // Predicated region
      $region9: #{tpu_custom_call.1} parent=5 // pred_check
        _
      $region10: #{tpu_custom_call.1} parent=5 // pred_check_branch
        %198 = sbr.rel (%p195) target = $region12
      $region11: #{tpu_custom_call.1} parent=5 // pred_region
        %s199 = ssub.s32 %s16, 1
        // Predicated region
        $region13: #{tpu_custom_call.1} parent=11 // pred_check
          %p200 = pneg %p54
        $region14: #{tpu_custom_call.1} parent=11 // pred_check_branch
          %202 = sbr.rel (%p200) target = $region16
        $region15: #{tpu_custom_call.1} parent=11 // pred_region
          %s203 = smul.u32 16, %s26
          %205 = vsyncadd [#allocation4], 0
          %s206 = smul.addr %s203, 4
          %s207 = scalar_lea.hbm %s0, %s206
          %s208 = sshll.u32 %s207, 4
          %s209 = int_to_ptr.hbm [resolvable:$true] %s208
          %s210 = sshll.u32 [#allocation3], 4
          %s211 = int_to_ptr.vmem [resolvable:$true] %s210
          %216 = dma.hbm_to_vmem [thread:$0]  %s209, 1024, %s211, [#allocation4], 64, 64, 4
        $region16: #{tpu_custom_call.1} parent=11 // pred_fallthru
          _
        // Predicated region
        $region17: #{tpu_custom_call.1} parent=11 // pred_check
          %p217 = pneg %p75
        $region18: #{tpu_custom_call.1} parent=11 // pred_check_branch
          %219 = sbr.rel (%p217) target = $region20
        $region19: #{tpu_custom_call.1} parent=11 // pred_region
          %221 = vsyncadd [#allocation7], 0
          %s222 = sshll.u32 %s1, 4
          %s223 = int_to_ptr.hbm [resolvable:$true] %s222
          %s224 = sshll.u32 [#allocation6], 4
          %s225 = int_to_ptr.vmem [resolvable:$true] %s224
          %230 = dma.hbm_to_vmem [thread:$0]  %s223, 1024, %s225, [#allocation7], 64, 64, 4
        $region20: #{tpu_custom_call.1} parent=11 // pred_fallthru
          _
        // Predicated region
        $region21: #{tpu_custom_call.1} parent=11 // pred_check
          %p231 = pneg %p96
        $region22: #{tpu_custom_call.1} parent=11 // pred_check_branch
          %233 = sbr.rel (%p231) target = $region24
        $region23: #{tpu_custom_call.1} parent=11 // pred_region
          %235 = vsyncadd [#allocation7], 0
          %s236 = sshll.u32 %s2, 4
          %s237 = int_to_ptr.hbm [resolvable:$true] %s236
          %s238 = sshll.u32 [#allocation8], 4
          %s239 = int_to_ptr.vmem [resolvable:$true] %s238
          %244 = dma.hbm_to_vmem [thread:$0]  %s237, 1024, %s239, [#allocation7], 64, 64, 4
        $region24: #{tpu_custom_call.1} parent=11 // pred_fallthru
          _
        // Predicated region
        $region25: #{tpu_custom_call.1} parent=11 // pred_check
          %p245 = pneg %p117
        $region26: #{tpu_custom_call.1} parent=11 // pred_check_branch
          %247 = sbr.rel (%p245) target = $region28
        $region27: #{tpu_custom_call.1} parent=11 // pred_region
          _
        $region28: #{tpu_custom_call.1} parent=11 // pred_fallthru
          _
        // Predicated region
        $region29: #{tpu_custom_call.1} parent=11 // pred_check
          %p248 = pneg %p138
        $region30: #{tpu_custom_call.1} parent=11 // pred_check_branch
          %250 = sbr.rel (%p248) target = $region32
        $region31: #{tpu_custom_call.1} parent=11 // pred_region
          %252 = vsyncadd [#allocation10], 0
          %s253 = sshll.u32 %s4, 4
          %s254 = int_to_ptr.hbm [resolvable:$true] %s253
          %s255 = sshll.u32 [#allocation9], 4
          %s256 = int_to_ptr.vmem [resolvable:$true] %s255
          %261 = dma.hbm_to_vmem [thread:$0]  %s254, 1024, %s256, [#allocation10], 64, 64, 4
        $region32: #{tpu_custom_call.1} parent=11 // pred_fallthru
          _
        // Predicated region
        $region33: #{tpu_custom_call.1} parent=11 // pred_check
          %p262 = pneg %p159
        $region34: #{tpu_custom_call.1} parent=11 // pred_check_branch
          %264 = sbr.rel (%p262) target = $region36
        $region35: #{tpu_custom_call.1} parent=11 // pred_region
          _
        $region36: #{tpu_custom_call.1} parent=11 // pred_fallthru
          _
      $region12: #{tpu_custom_call.1} parent=5 // pred_fallthru
        _
      %p265 = scmp.lt.s32.totalorder %s16, 2
      // Predicated region
      $region37: #{tpu_custom_call.1} parent=5 // pred_check
        %p266 = pneg %p265
      $region38: #{tpu_custom_call.1} parent=5 // pred_check_branch
        %268 = sbr.rel (%p266) target = $region40
      $region39: #{tpu_custom_call.1} parent=5 // pred_region
        _
      $region40: #{tpu_custom_call.1} parent=5 // pred_fallthru
        _
      %p269 = scmp.le.s32.totalorder 1, %s16
      %p270 = scmp.lt.s32.totalorder %s16, 3
      %p271 = pnand %p269, %p270
      %p272 = pneg %p271
      // Predicated region
      $region41: #{tpu_custom_call.1} parent=5 // pred_check
        _
      $region42: #{tpu_custom_call.1} parent=5 // pred_check_branch
        %274 = sbr.rel (%p271) target = $region44
      $region43: #{tpu_custom_call.1} parent=5 // pred_region
        %s275 = ssub.s32 %s16, 1
        // Predicated region
        $region45: #{tpu_custom_call.1} parent=43 // pred_check
          %p276 = pneg %p54
        $region46: #{tpu_custom_call.1} parent=43 // pred_check_branch
          %278 = sbr.rel (%p276) target = $region48
        $region47: #{tpu_custom_call.1} parent=43 // pred_region
          %280 = dma.done [#allocation4], 1024
        $region48: #{tpu_custom_call.1} parent=43 // pred_fallthru
          _
        // Predicated region
        $region49: #{tpu_custom_call.1} parent=43 // pred_check
          %p281 = pneg %p75
        $region50: #{tpu_custom_call.1} parent=43 // pred_check_branch
          %283 = sbr.rel (%p281) target = $region52
        $region51: #{tpu_custom_call.1} parent=43 // pred_region
          %285 = dma.done [#allocation7], 1024
        $region52: #{tpu_custom_call.1} parent=43 // pred_fallthru
          _
        // Predicated region
        $region53: #{tpu_custom_call.1} parent=43 // pred_check
          %p286 = pneg %p96
        $region54: #{tpu_custom_call.1} parent=43 // pred_check_branch
          %288 = sbr.rel (%p286) target = $region56
        $region55: #{tpu_custom_call.1} parent=43 // pred_region
          %290 = dma.done [#allocation7], 1024
        $region56: #{tpu_custom_call.1} parent=43 // pred_fallthru
          _
        // Predicated region
        $region57: #{tpu_custom_call.1} parent=43 // pred_check
          %p291 = pneg %p138
        $region58: #{tpu_custom_call.1} parent=43 // pred_check_branch
          %293 = sbr.rel (%p291) target = $region60
        $region59: #{tpu_custom_call.1} parent=43 // pred_region
          %295 = dma.done [#allocation10], 1024
        $region60: #{tpu_custom_call.1} parent=43 // pred_fallthru
          _
        %p296 = pneg %p54
        %p297 = pneg %p51
        %p298 = pneg %p75
        %p299 = pneg %p72
        %p300 = pneg %p96
        %p301 = pneg %p93
        %p302 = pneg %p117
        %p303 = pneg %p114
        %p304 = pneg %p138
        %p305 = pneg %p135
        %p306 = pneg %p159
        %p307 = pneg %p156
        %p308 = pneg %p185
        %p309 = pneg %p182
        %s310 = smul.u32 16, %s26
        %s311 = smul.u32 16, %s26
        %p312 = scmp.eq.s32.totalorder %s25, 0
        // Predicated region
        $region61: #{tpu_custom_call.1} parent=43 // pred_check
          %p313 = pneg %p312
        $region62: #{tpu_custom_call.1} parent=43 // pred_check_branch
          %315 = sbr.rel (%p313) target = $region64
        $region63: #{tpu_custom_call.1} parent=43 // pred_region
          %v316 = vld [vmem:[#allocation3] sm:$0xf]
          %v317 = vld [vmem:[#allocation3 + $0x4] sm:$0xf]
          %v318 = vld [vmem:[#allocation3 + $0x8] sm:$0xf]
          %v319 = vld [vmem:[#allocation3 + $0xc] sm:$0xf]
          %v320 = vld [vmem:[#allocation3 + $0x10] sm:$0xf]
          %v321 = vld [vmem:[#allocation3 + $0x14] sm:$0xf]
          %v322 = vld [vmem:[#allocation3 + $0x18] sm:$0xf]
          %v323 = vld [vmem:[#allocation3 + $0x1c] sm:$0xf]
          %v324 = vld [vmem:[#allocation3 + $0x20] sm:$0xf]
          %v325 = vld [vmem:[#allocation3 + $0x24] sm:$0xf]
          %v326 = vld [vmem:[#allocation3 + $0x28] sm:$0xf]
          %v327 = vld [vmem:[#allocation3 + $0x2c] sm:$0xf]
          %v328 = vld [vmem:[#allocation3 + $0x30] sm:$0xf]
          %v329 = vld [vmem:[#allocation3 + $0x34] sm:$0xf]
          %v330 = vld [vmem:[#allocation3 + $0x38] sm:$0xf]
          %v331 = vld [vmem:[#allocation3 + $0x3c] sm:$0xf]
          %v332 = vld [vmem:[#allocation6] sm:$0xf]
          %v333 = vld [vmem:[#allocation6 + $0x4] sm:$0xf]
          %v334 = vld [vmem:[#allocation6 + $0x8] sm:$0xf]
          %v335 = vld [vmem:[#allocation6 + $0xc] sm:$0xf]
          %v336 = vld [vmem:[#allocation6 + $0x10] sm:$0xf]
          %v337 = vld [vmem:[#allocation6 + $0x14] sm:$0xf]
          %v338 = vld [vmem:[#allocation6 + $0x18] sm:$0xf]
          %v339 = vld [vmem:[#allocation6 + $0x1c] sm:$0xf]
          %v340 = vld [vmem:[#allocation6 + $0x20] sm:$0xf]
          %v341 = vld [vmem:[#allocation6 + $0x24] sm:$0xf]
          %v342 = vld [vmem:[#allocation6 + $0x28] sm:$0xf]
          %v343 = vld [vmem:[#allocation6 + $0x2c] sm:$0xf]
          %v344 = vld [vmem:[#allocation6 + $0x30] sm:$0xf]
          %v345 = vld [vmem:[#allocation6 + $0x34] sm:$0xf]
          %v346 = vld [vmem:[#allocation6 + $0x38] sm:$0xf]
          %v347 = vld [vmem:[#allocation6 + $0x3c] sm:$0xf]
          %v364 = vunpack.c.l.b16 %v316
          %v365 = vunpack.c.l.b16 %v317
          %v366 = vunpack.c.l.b16 %v318
          %v367 = vunpack.c.l.b16 %v319
          %v368 = vunpack.c.l.b16 %v320
          %v369 = vunpack.c.l.b16 %v321
          %v370 = vunpack.c.l.b16 %v322
          %v371 = vunpack.c.l.b16 %v323
          %v372 = vunpack.c.l.b16 %v324
          %v373 = vunpack.c.l.b16 %v325
          %v374 = vunpack.c.l.b16 %v326
          %v375 = vunpack.c.l.b16 %v327
          %v376 = vunpack.c.l.b16 %v328
          %v377 = vunpack.c.l.b16 %v329
          %v378 = vunpack.c.l.b16 %v330
          %v379 = vunpack.c.l.b16 %v331
          %v380 = vpack.c.b16 %v365, %v364
          %v381 = vpack.c.b16 %v367, %v366
          %v382 = vpack.c.b16 %v369, %v368
          %v383 = vpack.c.b16 %v371, %v370
          %v384 = vpack.c.b16 %v373, %v372
          %v385 = vpack.c.b16 %v375, %v374
          %v386 = vpack.c.b16 %v377, %v376
          %v387 = vpack.c.b16 %v379, %v378
          %v412 = vunpack.c.l.b16 %v332
          %v413 = vunpack.c.l.b16 %v333
          %v414 = vunpack.c.l.b16 %v334
          %v415 = vunpack.c.l.b16 %v335
          %v416 = vunpack.c.l.b16 %v336
          %v417 = vunpack.c.l.b16 %v337
          %v418 = vunpack.c.l.b16 %v338
          %v419 = vunpack.c.l.b16 %v339
          %v420 = vunpack.c.l.b16 %v340
          %v421 = vunpack.c.l.b16 %v341
          %v422 = vunpack.c.l.b16 %v342
          %v423 = vunpack.c.l.b16 %v343
          %v424 = vunpack.c.l.b16 %v344
          %v425 = vunpack.c.l.b16 %v345
          %v426 = vunpack.c.l.b16 %v346
          %v427 = vunpack.c.l.b16 %v347
          %v428 = vpack.c.b16 %v413, %v412
          %v429 = vpack.c.b16 %v415, %v414
          %v430 = vpack.c.b16 %v417, %v416
          %v431 = vpack.c.b16 %v419, %v418
          %v432 = vpack.c.b16 %v421, %v420
          %v433 = vpack.c.b16 %v423, %v422
          %v434 = vpack.c.b16 %v425, %v424
          %v435 = vpack.c.b16 %v427, %v426
          %444 = vmatpush.bf16.msra.mxu0 %v435
          %445 = vmatpush.bf16.msra.mxu0 %v434
          %446 = vmatpush.bf16.msra.mxu0 %v433
          %447 = vmatpush.bf16.msra.mxu0 %v432
          %448 = vmatpush.bf16.msra.mxu0 %v431
          %449 = vmatpush.bf16.msra.mxu0 %v430
          %450 = vmatpush.bf16.msra.mxu0 %v429
          %451 = vmatpush.bf16.msra.mxu0 %v428
          %452 = vmatmul.bf16.gmra.mxu0 %v380
          %v453 = vpop.f32.mrf.mxu0
          %v454 = vadd.f32 0.0, %v453
          %v455 = vpop.f32.mrf.mxu0
          %v456 = vadd.f32 0.0, %v455
          %457 = vmatmul.bf16.gmra.mxu0 %v381
          %v458 = vpop.f32.mrf.mxu0
          %v459 = vadd.f32 0.0, %v458
          %v460 = vpop.f32.mrf.mxu0
          %v461 = vadd.f32 0.0, %v460
          %462 = vmatmul.bf16.gmra.mxu0 %v382
          %v463 = vpop.f32.mrf.mxu0
          %v464 = vadd.f32 0.0, %v463
          %v465 = vpop.f32.mrf.mxu0
          %v466 = vadd.f32 0.0, %v465
          %467 = vmatmul.bf16.gmra.mxu0 %v383
          %v468 = vpop.f32.mrf.mxu0
          %v469 = vadd.f32 0.0, %v468
          %v470 = vpop.f32.mrf.mxu0
          %v471 = vadd.f32 0.0, %v470
          %472 = vmatmul.bf16.gmra.mxu0 %v384
          %v473 = vpop.f32.mrf.mxu0
          %v474 = vadd.f32 0.0, %v473
          %v475 = vpop.f32.mrf.mxu0
          %v476 = vadd.f32 0.0, %v475
          %477 = vmatmul.bf16.gmra.mxu0 %v385
          %v478 = vpop.f32.mrf.mxu0
          %v479 = vadd.f32 0.0, %v478
          %v480 = vpop.f32.mrf.mxu0
          %v481 = vadd.f32 0.0, %v480
          %482 = vmatmul.bf16.gmra.mxu0 %v386
          %v483 = vpop.f32.mrf.mxu0
          %v484 = vadd.f32 0.0, %v483
          %v485 = vpop.f32.mrf.mxu0
          %v486 = vadd.f32 0.0, %v485
          %487 = vmatmul.bf16.gmra.mxu0 %v387
          %v488 = vpop.f32.mrf.mxu0
          %v489 = vadd.f32 0.0, %v488
          %v490 = vpop.f32.mrf.mxu0
          %v491 = vadd.f32 0.0, %v490
          %492 = vdwg.mxu0
          %v493 = vpack.c.bf16 %v456, %v454
          %v494 = vpack.c.bf16 %v461, %v459
          %v495 = vpack.c.bf16 %v466, %v464
          %v496 = vpack.c.bf16 %v471, %v469
          %v497 = vpack.c.bf16 %v476, %v474
          %v498 = vpack.c.bf16 %v481, %v479
          %v499 = vpack.c.bf16 %v486, %v484
          %v500 = vpack.c.bf16 %v491, %v489
          %v501 = vld [vmem:[#allocation8] sm:$0xf]
          %v502 = vld [vmem:[#allocation8 + $0x4] sm:$0xf]
          %v503 = vld [vmem:[#allocation8 + $0x8] sm:$0xf]
          %v504 = vld [vmem:[#allocation8 + $0xc] sm:$0xf]
          %v505 = vld [vmem:[#allocation8 + $0x10] sm:$0xf]
          %v506 = vld [vmem:[#allocation8 + $0x14] sm:$0xf]
          %v507 = vld [vmem:[#allocation8 + $0x18] sm:$0xf]
          %v508 = vld [vmem:[#allocation8 + $0x1c] sm:$0xf]
          %v509 = vld [vmem:[#allocation8 + $0x20] sm:$0xf]
          %v510 = vld [vmem:[#allocation8 + $0x24] sm:$0xf]
          %v511 = vld [vmem:[#allocation8 + $0x28] sm:$0xf]
          %v512 = vld [vmem:[#allocation8 + $0x2c] sm:$0xf]
          %v513 = vld [vmem:[#allocation8 + $0x30] sm:$0xf]
          %v514 = vld [vmem:[#allocation8 + $0x34] sm:$0xf]
          %v515 = vld [vmem:[#allocation8 + $0x38] sm:$0xf]
          %v516 = vld [vmem:[#allocation8 + $0x3c] sm:$0xf]
          %v517 = vld [vmem:[%s3] sm:$0x1]
          %v519 = vperm.slane %v517, 0
          %v537 = vunpack.c.l.b16 %v501
          %v538 = vunpack.c.l.b16 %v502
          %v539 = vunpack.c.l.b16 %v503
          %v540 = vunpack.c.l.b16 %v504
          %v541 = vunpack.c.l.b16 %v505
          %v542 = vunpack.c.l.b16 %v506
          %v543 = vunpack.c.l.b16 %v507
          %v544 = vunpack.c.l.b16 %v508
          %v545 = vunpack.c.l.b16 %v509
          %v546 = vunpack.c.l.b16 %v510
          %v547 = vunpack.c.l.b16 %v511
          %v548 = vunpack.c.l.b16 %v512
          %v549 = vunpack.c.l.b16 %v513
          %v550 = vunpack.c.l.b16 %v514
          %v551 = vunpack.c.l.b16 %v515
          %v552 = vunpack.c.l.b16 %v516
          %v553 = vpack.c.b16 %v538, %v537
          %v554 = vpack.c.b16 %v540, %v539
          %v555 = vpack.c.b16 %v542, %v541
          %v556 = vpack.c.b16 %v544, %v543
          %v557 = vpack.c.b16 %v546, %v545
          %v558 = vpack.c.b16 %v548, %v547
          %v559 = vpack.c.b16 %v550, %v549
          %v560 = vpack.c.b16 %v552, %v551
          %569 = vmatpush.bf16.msra.mxu0 %v560
          %570 = vmatpush.bf16.msra.mxu0 %v559
          %571 = vmatpush.bf16.msra.mxu0 %v558
          %572 = vmatpush.bf16.msra.mxu0 %v557
          %573 = vmatpush.bf16.msra.mxu0 %v556
          %574 = vmatpush.bf16.msra.mxu0 %v555
          %575 = vmatpush.bf16.msra.mxu0 %v554
          %576 = vmatpush.bf16.msra.mxu0 %v553
          %577 = vmatmul.bf16.gmra.mxu0 %v493
          %v578 = vpop.f32.mrf.mxu0
          %v579 = vadd.f32 %v519, %v578
          %v580 = vpop.f32.mrf.mxu0
          %v581 = vadd.f32 %v519, %v580
          %582 = vmatmul.bf16.gmra.mxu0 %v494
          %v583 = vpop.f32.mrf.mxu0
          %v584 = vadd.f32 %v519, %v583
          %v585 = vpop.f32.mrf.mxu0
          %v586 = vadd.f32 %v519, %v585
          %587 = vmatmul.bf16.gmra.mxu0 %v495
          %v588 = vpop.f32.mrf.mxu0
          %v589 = vadd.f32 %v519, %v588
          %v590 = vpop.f32.mrf.mxu0
          %v591 = vadd.f32 %v519, %v590
          %592 = vmatmul.bf16.gmra.mxu0 %v496
          %v593 = vpop.f32.mrf.mxu0
          %v594 = vadd.f32 %v519, %v593
          %v595 = vpop.f32.mrf.mxu0
          %v596 = vadd.f32 %v519, %v595
          %597 = vmatmul.bf16.gmra.mxu0 %v497
          %v598 = vpop.f32.mrf.mxu0
          %v599 = vadd.f32 %v519, %v598
          %v600 = vpop.f32.mrf.mxu0
          %v601 = vadd.f32 %v519, %v600
          %602 = vmatmul.bf16.gmra.mxu0 %v498
          %v603 = vpop.f32.mrf.mxu0
          %v604 = vadd.f32 %v519, %v603
          %v605 = vpop.f32.mrf.mxu0
          %v606 = vadd.f32 %v519, %v605
          %607 = vmatmul.bf16.gmra.mxu0 %v499
          %v608 = vpop.f32.mrf.mxu0
          %v609 = vadd.f32 %v519, %v608
          %v610 = vpop.f32.mrf.mxu0
          %v611 = vadd.f32 %v519, %v610
          %612 = vmatmul.bf16.gmra.mxu0 %v500
          %v613 = vpop.f32.mrf.mxu0
          %v614 = vadd.f32 %v519, %v613
          %v615 = vpop.f32.mrf.mxu0
          %v616 = vadd.f32 %v519, %v615
          %617 = vdwg.mxu0
          %v618 = vmax.f32 %v579, 0.0
          %v619 = vmax.f32 %v581, 0.0
          %v620 = vmax.f32 %v584, 0.0
          %v621 = vmax.f32 %v586, 0.0
          %v622 = vmax.f32 %v589, 0.0
          %v623 = vmax.f32 %v591, 0.0
          %v624 = vmax.f32 %v594, 0.0
          %v625 = vmax.f32 %v596, 0.0
          %v626 = vmax.f32 %v599, 0.0
          %v627 = vmax.f32 %v601, 0.0
          %v628 = vmax.f32 %v604, 0.0
          %v629 = vmax.f32 %v606, 0.0
          %v630 = vmax.f32 %v609, 0.0
          %v631 = vmax.f32 %v611, 0.0
          %v632 = vmax.f32 %v614, 0.0
          %v633 = vmax.f32 %v616, 0.0
          %s634 = smul.u32 %s26, 128
          %v635 = vpack.c.bf16 %v618, %v618
          %v636 = vpack.c.bf16 %v619, %v619
          %v637 = vpack.c.bf16 %v620, %v620
          %v638 = vpack.c.bf16 %v621, %v621
          %v639 = vpack.c.bf16 %v622, %v622
          %v640 = vpack.c.bf16 %v623, %v623
          %v641 = vpack.c.bf16 %v624, %v624
          %v642 = vpack.c.bf16 %v625, %v625
          %v643 = vpack.c.bf16 %v626, %v626
          %v644 = vpack.c.bf16 %v627, %v627
          %v645 = vpack.c.bf16 %v628, %v628
          %v646 = vpack.c.bf16 %v629, %v629
          %v647 = vpack.c.bf16 %v630, %v630
          %v648 = vpack.c.bf16 %v631, %v631
          %v649 = vpack.c.bf16 %v632, %v632
          %v650 = vpack.c.bf16 %v633, %v633
          %s651 = sshra.s32 %s634, 3
          %s652 = sand.u32 %s634, 7
          %s653 = smul.addr %s651, 4
          %s654 = scalar_lea.vmem [#allocation2], %s653
          %655 = vst [vmem:[%s654] sm:$0xf] %v635
          %656 = vst [vmem:[%s654 + $0x4] sm:$0xf] %v636
          %657 = vst [vmem:[%s654 + $0x8] sm:$0xf] %v637
          %658 = vst [vmem:[%s654 + $0xc] sm:$0xf] %v638
          %659 = vst [vmem:[%s654 + $0x10] sm:$0xf] %v639
          %660 = vst [vmem:[%s654 + $0x14] sm:$0xf] %v640
          %661 = vst [vmem:[%s654 + $0x18] sm:$0xf] %v641
          %662 = vst [vmem:[%s654 + $0x1c] sm:$0xf] %v642
          %663 = vst [vmem:[%s654 + $0x20] sm:$0xf] %v643
          %664 = vst [vmem:[%s654 + $0x24] sm:$0xf] %v644
          %665 = vst [vmem:[%s654 + $0x28] sm:$0xf] %v645
          %666 = vst [vmem:[%s654 + $0x2c] sm:$0xf] %v646
          %667 = vst [vmem:[%s654 + $0x30] sm:$0xf] %v647
          %668 = vst [vmem:[%s654 + $0x34] sm:$0xf] %v648
          %669 = vst [vmem:[%s654 + $0x38] sm:$0xf] %v649
          %670 = vst [vmem:[%s654 + $0x3c] sm:$0xf] %v650
          %671 = vst [vmem:[#allocation11] sm:$0xff] 0.0
          %672 = vst [vmem:[#allocation11 + $0x8] sm:$0xff] 0.0
          %673 = vst [vmem:[#allocation11 + $0x10] sm:$0xff] 0.0
          %674 = vst [vmem:[#allocation11 + $0x18] sm:$0xff] 0.0
          %675 = vst [vmem:[#allocation11 + $0x20] sm:$0xff] 0.0
          %676 = vst [vmem:[#allocation11 + $0x28] sm:$0xff] 0.0
          %677 = vst [vmem:[#allocation11 + $0x30] sm:$0xff] 0.0
          %678 = vst [vmem:[#allocation11 + $0x38] sm:$0xff] 0.0
          %679 = vst [vmem:[#allocation11 + $0x40] sm:$0xff] 0.0
          %680 = vst [vmem:[#allocation11 + $0x48] sm:$0xff] 0.0
          %681 = vst [vmem:[#allocation11 + $0x50] sm:$0xff] 0.0
          %682 = vst [vmem:[#allocation11 + $0x58] sm:$0xff] 0.0
          %683 = vst [vmem:[#allocation11 + $0x60] sm:$0xff] 0.0
          %684 = vst [vmem:[#allocation11 + $0x68] sm:$0xff] 0.0
          %685 = vst [vmem:[#allocation11 + $0x70] sm:$0xff] 0.0
          %686 = vst [vmem:[#allocation11 + $0x78] sm:$0xff] 0.0
        $region64: #{tpu_custom_call.1} parent=43 // pred_fallthru
          _
        %p687 = scmp.eq.s32.totalorder %s25, 1
        // Predicated region
        $region65: #{tpu_custom_call.1} parent=43 // pred_check
          %p688 = pneg %p687
        $region66: #{tpu_custom_call.1} parent=43 // pred_check_branch
          %690 = sbr.rel (%p688) target = $region68
        $region67: #{tpu_custom_call.1} parent=43 // pred_region
          %v691 = vld [vmem:[#allocation3] sm:$0xf]
          %v692 = vld [vmem:[#allocation3 + $0x4] sm:$0xf]
          %v693 = vld [vmem:[#allocation3 + $0x8] sm:$0xf]
          %v694 = vld [vmem:[#allocation3 + $0xc] sm:$0xf]
          %v695 = vld [vmem:[#allocation3 + $0x10] sm:$0xf]
          %v696 = vld [vmem:[#allocation3 + $0x14] sm:$0xf]
          %v697 = vld [vmem:[#allocation3 + $0x18] sm:$0xf]
          %v698 = vld [vmem:[#allocation3 + $0x1c] sm:$0xf]
          %v699 = vld [vmem:[#allocation3 + $0x20] sm:$0xf]
          %v700 = vld [vmem:[#allocation3 + $0x24] sm:$0xf]
          %v701 = vld [vmem:[#allocation3 + $0x28] sm:$0xf]
          %v702 = vld [vmem:[#allocation3 + $0x2c] sm:$0xf]
          %v703 = vld [vmem:[#allocation3 + $0x30] sm:$0xf]
          %v704 = vld [vmem:[#allocation3 + $0x34] sm:$0xf]
          %v705 = vld [vmem:[#allocation3 + $0x38] sm:$0xf]
          %v706 = vld [vmem:[#allocation3 + $0x3c] sm:$0xf]
          %v707 = vld [vmem:[#allocation2] sm:$0xf]
          %v708 = vld [vmem:[#allocation2 + $0x4] sm:$0xf]
          %v709 = vld [vmem:[#allocation2 + $0x8] sm:$0xf]
          %v710 = vld [vmem:[#allocation2 + $0xc] sm:$0xf]
          %v711 = vld [vmem:[#allocation2 + $0x10] sm:$0xf]
          %v712 = vld [vmem:[#allocation2 + $0x14] sm:$0xf]
          %v713 = vld [vmem:[#allocation2 + $0x18] sm:$0xf]
          %v714 = vld [vmem:[#allocation2 + $0x1c] sm:$0xf]
          %v715 = vld [vmem:[#allocation2 + $0x20] sm:$0xf]
          %v716 = vld [vmem:[#allocation2 + $0x24] sm:$0xf]
          %v717 = vld [vmem:[#allocation2 + $0x28] sm:$0xf]
          %v718 = vld [vmem:[#allocation2 + $0x2c] sm:$0xf]
          %v719 = vld [vmem:[#allocation2 + $0x30] sm:$0xf]
          %v720 = vld [vmem:[#allocation2 + $0x34] sm:$0xf]
          %v721 = vld [vmem:[#allocation2 + $0x38] sm:$0xf]
          %v722 = vld [vmem:[#allocation2 + $0x3c] sm:$0xf]
          %v739 = vunpack.c.l.b16 %v691
          %v740 = vunpack.c.l.b16 %v692
          %v741 = vunpack.c.l.b16 %v693
          %v742 = vunpack.c.l.b16 %v694
          %v743 = vunpack.c.l.b16 %v695
          %v744 = vunpack.c.l.b16 %v696
          %v745 = vunpack.c.l.b16 %v697
          %v746 = vunpack.c.l.b16 %v698
          %v747 = vunpack.c.l.b16 %v699
          %v748 = vunpack.c.l.b16 %v700
          %v749 = vunpack.c.l.b16 %v701
          %v750 = vunpack.c.l.b16 %v702
          %v751 = vunpack.c.l.b16 %v703
          %v752 = vunpack.c.l.b16 %v704
          %v753 = vunpack.c.l.b16 %v705
          %v754 = vunpack.c.l.b16 %v706
          %v755 = vpack.c.b16 %v740, %v739
          %v756 = vpack.c.b16 %v742, %v741
          %v757 = vpack.c.b16 %v744, %v743
          %v758 = vpack.c.b16 %v746, %v745
          %v759 = vpack.c.b16 %v748, %v747
          %v760 = vpack.c.b16 %v750, %v749
          %v761 = vpack.c.b16 %v752, %v751
          %v762 = vpack.c.b16 %v754, %v753
          %v787 = vunpack.c.l.b16 %v707
          %v788 = vunpack.c.l.b16 %v708
          %v789 = vunpack.c.l.b16 %v709
          %v790 = vunpack.c.l.b16 %v710
          %v791 = vunpack.c.l.b16 %v711
          %v792 = vunpack.c.l.b16 %v712
          %v793 = vunpack.c.l.b16 %v713
          %v794 = vunpack.c.l.b16 %v714
          %v795 = vunpack.c.l.b16 %v715
          %v796 = vunpack.c.l.b16 %v716
          %v797 = vunpack.c.l.b16 %v717
          %v798 = vunpack.c.l.b16 %v718
          %v799 = vunpack.c.l.b16 %v719
          %v800 = vunpack.c.l.b16 %v720
          %v801 = vunpack.c.l.b16 %v721
          %v802 = vunpack.c.l.b16 %v722
          %v803 = vpack.c.b16 %v788, %v787
          %v804 = vpack.c.b16 %v790, %v789
          %v805 = vpack.c.b16 %v792, %v791
          %v806 = vpack.c.b16 %v794, %v793
          %v807 = vpack.c.b16 %v796, %v795
          %v808 = vpack.c.b16 %v798, %v797
          %v809 = vpack.c.b16 %v800, %v799
          %v810 = vpack.c.b16 %v802, %v801
          %819 = vmatpush.bf16.msra.mxu0 %v810
          %820 = vmatpush.bf16.msra.mxu0 %v809
          %821 = vmatpush.bf16.msra.mxu0 %v808
          %822 = vmatpush.bf16.msra.mxu0 %v807
          %823 = vmatpush.bf16.msra.mxu0 %v806
          %824 = vmatpush.bf16.msra.mxu0 %v805
          %825 = vmatpush.bf16.msra.mxu0 %v804
          %826 = vmatpush.bf16.msra.mxu0 %v803
          %827 = vmatmul.bf16.gmra.mxu0 %v755
          %v828 = vpop.f32.mrf.mxu0
          %v829 = vadd.f32 0.0, %v828
          %v830 = vpop.f32.mrf.mxu0
          %v831 = vadd.f32 0.0, %v830
          %832 = vmatmul.bf16.gmra.mxu0 %v756
          %v833 = vpop.f32.mrf.mxu0
          %v834 = vadd.f32 0.0, %v833
          %v835 = vpop.f32.mrf.mxu0
          %v836 = vadd.f32 0.0, %v835
          %837 = vmatmul.bf16.gmra.mxu0 %v757
          %v838 = vpop.f32.mrf.mxu0
          %v839 = vadd.f32 0.0, %v838
          %v840 = vpop.f32.mrf.mxu0
          %v841 = vadd.f32 0.0, %v840
          %842 = vmatmul.bf16.gmra.mxu0 %v758
          %v843 = vpop.f32.mrf.mxu0
          %v844 = vadd.f32 0.0, %v843
          %v845 = vpop.f32.mrf.mxu0
          %v846 = vadd.f32 0.0, %v845
          %847 = vmatmul.bf16.gmra.mxu0 %v759
          %v848 = vpop.f32.mrf.mxu0
          %v849 = vadd.f32 0.0, %v848
          %v850 = vpop.f32.mrf.mxu0
          %v851 = vadd.f32 0.0, %v850
          %852 = vmatmul.bf16.gmra.mxu0 %v760
          %v853 = vpop.f32.mrf.mxu0
          %v854 = vadd.f32 0.0, %v853
          %v855 = vpop.f32.mrf.mxu0
          %v856 = vadd.f32 0.0, %v855
          %857 = vmatmul.bf16.gmra.mxu0 %v761
          %v858 = vpop.f32.mrf.mxu0
          %v859 = vadd.f32 0.0, %v858
          %v860 = vpop.f32.mrf.mxu0
          %v861 = vadd.f32 0.0, %v860
          %862 = vmatmul.bf16.gmra.mxu0 %v762
          %v863 = vpop.f32.mrf.mxu0
          %v864 = vadd.f32 0.0, %v863
          %v865 = vpop.f32.mrf.mxu0
          %v866 = vadd.f32 0.0, %v865
          %867 = vdwg.mxu0
          %v868 = vpack.c.bf16 %v831, %v829
          %v869 = vpack.c.bf16 %v836, %v834
          %v870 = vpack.c.bf16 %v841, %v839
          %v871 = vpack.c.bf16 %v846, %v844
          %v872 = vpack.c.bf16 %v851, %v849
          %v873 = vpack.c.bf16 %v856, %v854
          %v874 = vpack.c.bf16 %v861, %v859
          %v875 = vpack.c.bf16 %v866, %v864
          %v876 = vld [vmem:[#allocation9] sm:$0xf]
          %v877 = vld [vmem:[#allocation9 + $0x4] sm:$0xf]
          %v878 = vld [vmem:[#allocation9 + $0x8] sm:$0xf]
          %v879 = vld [vmem:[#allocation9 + $0xc] sm:$0xf]
          %v880 = vld [vmem:[#allocation9 + $0x10] sm:$0xf]
          %v881 = vld [vmem:[#allocation9 + $0x14] sm:$0xf]
          %v882 = vld [vmem:[#allocation9 + $0x18] sm:$0xf]
          %v883 = vld [vmem:[#allocation9 + $0x1c] sm:$0xf]
          %v884 = vld [vmem:[#allocation9 + $0x20] sm:$0xf]
          %v885 = vld [vmem:[#allocation9 + $0x24] sm:$0xf]
          %v886 = vld [vmem:[#allocation9 + $0x28] sm:$0xf]
          %v887 = vld [vmem:[#allocation9 + $0x2c] sm:$0xf]
          %v888 = vld [vmem:[#allocation9 + $0x30] sm:$0xf]
          %v889 = vld [vmem:[#allocation9 + $0x34] sm:$0xf]
          %v890 = vld [vmem:[#allocation9 + $0x38] sm:$0xf]
          %v891 = vld [vmem:[#allocation9 + $0x3c] sm:$0xf]
          %v892 = vld [vmem:[%s5] sm:$0x1]
          %v894 = vperm.slane %v892, 0
          %v912 = vunpack.c.l.b16 %v876
          %v913 = vunpack.c.l.b16 %v877
          %v914 = vunpack.c.l.b16 %v878
          %v915 = vunpack.c.l.b16 %v879
          %v916 = vunpack.c.l.b16 %v880
          %v917 = vunpack.c.l.b16 %v881
          %v918 = vunpack.c.l.b16 %v882
          %v919 = vunpack.c.l.b16 %v883
          %v920 = vunpack.c.l.b16 %v884
          %v921 = vunpack.c.l.b16 %v885
          %v922 = vunpack.c.l.b16 %v886
          %v923 = vunpack.c.l.b16 %v887
          %v924 = vunpack.c.l.b16 %v888
          %v925 = vunpack.c.l.b16 %v889
          %v926 = vunpack.c.l.b16 %v890
          %v927 = vunpack.c.l.b16 %v891
          %v928 = vpack.c.b16 %v913, %v912
          %v929 = vpack.c.b16 %v915, %v914
          %v930 = vpack.c.b16 %v917, %v916
          %v931 = vpack.c.b16 %v919, %v918
          %v932 = vpack.c.b16 %v921, %v920
          %v933 = vpack.c.b16 %v923, %v922
          %v934 = vpack.c.b16 %v925, %v924
          %v935 = vpack.c.b16 %v927, %v926
          %944 = vmatpush.bf16.msra.mxu0 %v935
          %945 = vmatpush.bf16.msra.mxu0 %v934
          %946 = vmatpush.bf16.msra.mxu0 %v933
          %947 = vmatpush.bf16.msra.mxu0 %v932
          %948 = vmatpush.bf16.msra.mxu0 %v931
          %949 = vmatpush.bf16.msra.mxu0 %v930
          %950 = vmatpush.bf16.msra.mxu0 %v929
          %951 = vmatpush.bf16.msra.mxu0 %v928
          %952 = vmatmul.bf16.gmra.mxu0 %v868
          %v953 = vpop.f32.mrf.mxu0
          %v954 = vadd.f32 %v894, %v953
          %v955 = vpop.f32.mrf.mxu0
          %v956 = vadd.f32 %v894, %v955
          %957 = vmatmul.bf16.gmra.mxu0 %v869
          %v958 = vpop.f32.mrf.mxu0
          %v959 = vadd.f32 %v894, %v958
          %v960 = vpop.f32.mrf.mxu0
          %v961 = vadd.f32 %v894, %v960
          %962 = vmatmul.bf16.gmra.mxu0 %v870
          %v963 = vpop.f32.mrf.mxu0
          %v964 = vadd.f32 %v894, %v963
          %v965 = vpop.f32.mrf.mxu0
          %v966 = vadd.f32 %v894, %v965
          %967 = vmatmul.bf16.gmra.mxu0 %v871
          %v968 = vpop.f32.mrf.mxu0
          %v969 = vadd.f32 %v894, %v968
          %v970 = vpop.f32.mrf.mxu0
          %v971 = vadd.f32 %v894, %v970
          %972 = vmatmul.bf16.gmra.mxu0 %v872
          %v973 = vpop.f32.mrf.mxu0
          %v974 = vadd.f32 %v894, %v973
          %v975 = vpop.f32.mrf.mxu0
          %v976 = vadd.f32 %v894, %v975
          %977 = vmatmul.bf16.gmra.mxu0 %v873
          %v978 = vpop.f32.mrf.mxu0
          %v979 = vadd.f32 %v894, %v978
          %v980 = vpop.f32.mrf.mxu0
          %v981 = vadd.f32 %v894, %v980
          %982 = vmatmul.bf16.gmra.mxu0 %v874
          %v983 = vpop.f32.mrf.mxu0
          %v984 = vadd.f32 %v894, %v983
          %v985 = vpop.f32.mrf.mxu0
          %v986 = vadd.f32 %v894, %v985
          %987 = vmatmul.bf16.gmra.mxu0 %v875
          %v988 = vpop.f32.mrf.mxu0
          %v989 = vadd.f32 %v894, %v988
          %v990 = vpop.f32.mrf.mxu0
          %v991 = vadd.f32 %v894, %v990
          %992 = vdwg.mxu0
          %993 = vst [vmem:[#allocation11] sm:$0xff] %v954
          %994 = vst [vmem:[#allocation11 + $0x8] sm:$0xff] %v956
          %995 = vst [vmem:[#allocation11 + $0x10] sm:$0xff] %v959
          %996 = vst [vmem:[#allocation11 + $0x18] sm:$0xff] %v961
          %997 = vst [vmem:[#allocation11 + $0x20] sm:$0xff] %v964
          %998 = vst [vmem:[#allocation11 + $0x28] sm:$0xff] %v966
          %999 = vst [vmem:[#allocation11 + $0x30] sm:$0xff] %v969
          %1000 = vst [vmem:[#allocation11 + $0x38] sm:$0xff] %v971
          %1001 = vst [vmem:[#allocation11 + $0x40] sm:$0xff] %v974
          %1002 = vst [vmem:[#allocation11 + $0x48] sm:$0xff] %v976
          %1003 = vst [vmem:[#allocation11 + $0x50] sm:$0xff] %v979
          %1004 = vst [vmem:[#allocation11 + $0x58] sm:$0xff] %v981
          %1005 = vst [vmem:[#allocation11 + $0x60] sm:$0xff] %v984
          %1006 = vst [vmem:[#allocation11 + $0x68] sm:$0xff] %v986
          %1007 = vst [vmem:[#allocation11 + $0x70] sm:$0xff] %v989
          %1008 = vst [vmem:[#allocation11 + $0x78] sm:$0xff] %v991
        $region68: #{tpu_custom_call.1} parent=43 // pred_fallthru
          _
        // Predicated region
        $region69: #{tpu_custom_call.1} parent=43 // pred_check
          %p1009 = pneg %p182
        $region70: #{tpu_custom_call.1} parent=43 // pred_check_branch
          %1011 = sbr.rel (%p1009) target = $region72
        $region71: #{tpu_custom_call.1} parent=43 // pred_region
          %s1012 = smul.u32 16, %s26
          %1014 = vsyncadd [#allocation5], 0
          %s1015 = smul.addr %s1012, 8
          %s1016 = scalar_lea.hbm %s6, %s1015
          %s1017 = sshll.u32 [#allocation11], 4
          %s1018 = int_to_ptr.vmem [resolvable:$true] %s1017
          %s1019 = sshll.u32 %s1016, 4
          %s1020 = int_to_ptr.hbm [resolvable:$true] %s1019
          %1025 = dma.vmem_to_hbm [thread:$0]  %s1018, 2048, %s1020, [#allocation5], 128, 128, 8
        $region72: #{tpu_custom_call.1} parent=43 // pred_fallthru
          _
        // Predicated region
        $region73: #{tpu_custom_call.1} parent=43 // pred_check
          %p1026 = pneg %p182
        $region74: #{tpu_custom_call.1} parent=43 // pred_check_branch
          %1028 = sbr.rel (%p1026) target = $region76
        $region75: #{tpu_custom_call.1} parent=43 // pred_region
          %1030 = dma.done [#allocation5], 2048
        $region76: #{tpu_custom_call.1} parent=43 // pred_fallthru
          _
      $region44: #{tpu_custom_call.1} parent=5 // pred_fallthru
        _
      %p1031 = scmp.le.s32.totalorder 2, %s16
      // Predicated region
      $region77: #{tpu_custom_call.1} parent=5 // pred_check
        %p1032 = pneg %p1031
      $region78: #{tpu_custom_call.1} parent=5 // pred_check_branch
        %1034 = sbr.rel (%p1032) target = $region80
      $region79: #{tpu_custom_call.1} parent=5 // pred_region
        %s1035 = ssub.s32 %s16, 2
      $region80: #{tpu_custom_call.1} parent=5 // pred_fallthru
        _
    $region6: #{tpu_custom_call.1} parent=1 // loop_footer
      %s20 = sadd.s32 1, %s16
    $region7: #{tpu_custom_call.1} parent=1 // loop_footer_branch
      %15 = sbr.rel target = $region3
    $region8: #{tpu_custom_call.1} parent=1 // loop_exit
      _
    %1036 = vsyncpa [#allocation4], 1
    %s1037 = scalar_lea.sflag [#allocation4], 1
    %1038 = vsyncpa %s1037, 1
    %1039 = vsyncpa [#allocation7], 1
    %1040 = vsyncpa [#allocation10], 1
    %1041 = vsyncpa [#allocation5], 1
    %s1042 = scalar_lea.sflag [#allocation5], 1
    %1043 = vsyncpa %s1042, 1

</llo_original>
